<compile_context>
chip_gen: v7x
topology: tpu7x:2x2x1
jax: 0.10.0
libtpu: 0.0.40
codegen_flags: <defaults>
</compile_context>

<pallas_src>
import functools

import jax
import jax.numpy as jnp
from jax.experimental import pallas as pl
from jax.experimental.pallas import tpu as pltpu


INPUT_DIM = 32
LATENT_DIM = 50
HIDDEN = (200, 200, 200, 100)
TILE_M = 256                      # rows of x (and of x_prime) per grid step


def _round_up(x, m):
    return (x + m - 1) // m * m


def _lane_pad(d):
    return _round_up(d, 128)


def _kernel(x_ref,
            w1, b1, w2, b2, w3, b3, w4, b4, w5, b5,
            whx, whp, bh,
            out_ref):
    """One grid step: (2*tile_m, D) stacked [x_tile; x'_tile] -> (tile_m, 1)."""
    tm = out_ref.shape[0]

    h = x_ref[...]                                                  # bf16 (2*tm, D)

    def layer(a, w, b):
        y = jnp.dot(a, w[...], preferred_element_type=jnp.float32) + b[...]
        return jnp.maximum(y, 0.0)                                  # f32

    h = layer(h, w1, b1).astype(jnp.bfloat16)
    h = layer(h, w2, b2).astype(jnp.bfloat16)
    h = layer(h, w3, b3).astype(jnp.bfloat16)
    h = layer(h, w4, b4).astype(jnp.bfloat16)
    z = layer(h, w5, b5)                        # f32; module applies ReLU after last embed layer

    # tm is a multiple of 8, so these sublane slices are tile-aligned (cheap).
    z_x, z_p = z[:tm], z[tm:]
    # head: Linear(2*latent, 1) on concat([z_x, z_p]) == z_x @ Wx + z_p @ Wp + b.
    s = z_x * whx[...] + z_p * whp[...]                             # (tm, Dlat) f32
    out_ref[...] = jnp.sum(s, axis=-1, keepdims=True) + bh[...]


def init_params(key, input_dim=INPUT_DIM, latent_dim=LATENT_DIM):
    """PyTorch-style uniform init, zero-padded to lane multiples; weights in bf16."""
    dims = (input_dim,) + HIDDEN + (latent_dim,)
    pdims = tuple(_lane_pad(d) for d in dims)

    embed = []
    for i in range(len(dims) - 1):
        key, kw, kb = jax.random.split(key, 3)
        fi, fo = dims[i], dims[i + 1]
        bound = 1.0 / (fi ** 0.5)
        w = jax.random.uniform(kw, (fi, fo), jnp.float32, -bound, bound)
        b = jax.random.uniform(kb, (fo,), jnp.float32, -bound, bound)
        wp = jnp.zeros((pdims[i], pdims[i + 1]), jnp.float32).at[:fi, :fo].set(w)
        bp = jnp.zeros((1, pdims[i + 1]), jnp.float32).at[0, :fo].set(b)
        embed.append((wp.astype(jnp.bfloat16), bp))

    # Head: Linear(2*latent -> 1), split into the x-half and x_prime-half weights.
    key, kw, kb = jax.random.split(key, 3)
    bound = 1.0 / ((2 * latent_dim) ** 0.5)
    w_head = jax.random.uniform(kw, (2 * latent_dim,), jnp.float32, -bound, bound)
    b_head = jax.random.uniform(kb, (), jnp.float32, -bound, bound)
    dlat = pdims[-1]
    whx = jnp.zeros((1, dlat), jnp.float32).at[0, :latent_dim].set(w_head[:latent_dim])
    whp = jnp.zeros((1, dlat), jnp.float32).at[0, :latent_dim].set(w_head[latent_dim:])
    bh = jnp.full((1, 1), b_head, jnp.float32)
    return embed, (whx, whp, bh)


def global_metric_linear(x, x_prime, params, *, tile_m=TILE_M):
    """forward(x, x_prime) -> (*batch, 1), matching the PyTorch module."""
    embed_params, (whx, whp, bh) = params
    x, x_prime = jnp.broadcast_arrays(x, x_prime)
    *b, W = x.shape
    d0 = embed_params[0][0].shape[0]            # padded input dim

    xf = x.reshape(-1, W).astype(jnp.float32)
    xpf = x_prime.reshape(-1, W).astype(jnp.float32)
    N = xf.shape[0]

    # Shrink the row tile for small batches (keeps an MXU-friendly, 128-multiple
    # M dim after stacking while avoiding huge zero-row padding).
    tile_m = min(tile_m, max(128, _round_up(N, 128)))
    nt = pl.cdiv(N, tile_m)
    n_pad = nt * tile_m

    def pad_cast(v):
        v = jnp.pad(v, ((0, n_pad - N), (0, d0 - W)))
        return v.astype(jnp.bfloat16).reshape(nt, tile_m, d0)

    # Interleave per-tile so each grid step reads one contiguous (2*tile_m, d0)
    # block [x_tile; x_prime_tile] and the 5-layer MLP runs once per step.
    x_all = jnp.concatenate([pad_cast(xf), pad_cast(xpf)], axis=1)
    x_all = x_all.reshape(nt * 2 * tile_m, d0)

    flat_w = [p for wb in embed_params for p in wb] + [whx, whp, bh]
    # Whole-array, constant-index blocks: resident in VMEM for the whole grid.
    w_specs = [pl.BlockSpec(p.shape, lambda i: (0, 0)) for p in flat_w]

    out = pl.pallas_call(
        _kernel,
        out_shape=jax.ShapeDtypeStruct((n_pad, 1), jnp.float32),
        grid_spec=pltpu.PrefetchScalarGridSpec(
            num_scalar_prefetch=0,
            grid=(nt,),
            in_specs=[pl.BlockSpec((2 * tile_m, d0), lambda i: (i, 0))] + w_specs,
            out_specs=pl.BlockSpec((tile_m, 1), lambda i: (i, 0)),
        ),
        compiler_params=pltpu.CompilerParams(
            dimension_semantics=("parallel",)),
    )(x_all, *flat_w)

    return out[:N].reshape(*b, 1)


def _reference(x, x_prime, params):
    """Pure-JAX reference mirroring the kernel numerics (bf16 operands, f32 accum)."""
    embed_params, (whx, whp, bh) = params
    x, x_prime = jnp.broadcast_arrays(x, x_prime)
    *b, W = x.shape
    d0 = embed_params[0][0].shape[0]

    def embed(v):
        h = v.reshape(-1, W).astype(jnp.float32)
        h = jnp.pad(h, ((0, 0), (0, d0 - W)))
        for w, bb in embed_params:
            h = jnp.maximum(
                jnp.dot(h.astype(jnp.bfloat16), w,
                        preferred_element_type=jnp.float32) + bb, 0.0)
        return h                                                    # f32

    z_x, z_p = embed(x), embed(x_prime)
    out = jnp.sum(z_x * whx + z_p * whp, axis=-1, keepdims=True) + bh
    return out.reshape(*b, 1)


if __name__ == "__main__":
    key = jax.random.PRNGKey(0)
    kp, kx, kxp = jax.random.split(key, 3)

    params = init_params(kp)

    # batch dims (2, 8), feature dim = INPUT_DIM; x_prime broadcasts over axis 0.
    x = jax.random.normal(kx, (2, 8, INPUT_DIM), jnp.float32)
    x_prime = jax.random.normal(kxp, (1, 8, INPUT_DIM), jnp.float32)

    fn = jax.jit(functools.partial(global_metric_linear, params=params))
    out = jax.block_until_ready(fn(x, x_prime))

    ref = _reference(x, x_prime, params)
    assert out.shape == (2, 8, 1), out.shape
    err = float(jnp.max(jnp.abs(out - ref)))
    assert jnp.allclose(out, ref, atol=2e-3, rtol=2e-3), err

    print("KERNEL_OK")
</pallas_src>

<mosaic_0001>
module attributes {stable_mosaic.version = 11 : i64} {
  func.func @_kernel(%arg0: i32, %arg1: memref<256x128xbf16, #tpu.memory_space<vmem>>, %arg2: memref<128x256xbf16, #tpu.memory_space<vmem>>, %arg3: memref<1x256xf32, #tpu.memory_space<vmem>>, %arg4: memref<256x256xbf16, #tpu.memory_space<vmem>>, %arg5: memref<1x256xf32, #tpu.memory_space<vmem>>, %arg6: memref<256x256xbf16, #tpu.memory_space<vmem>>, %arg7: memref<1x256xf32, #tpu.memory_space<vmem>>, %arg8: memref<256x128xbf16, #tpu.memory_space<vmem>>, %arg9: memref<1x128xf32, #tpu.memory_space<vmem>>, %arg10: memref<128x128xbf16, #tpu.memory_space<vmem>>, %arg11: memref<1x128xf32, #tpu.memory_space<vmem>>, %arg12: memref<1x128xf32, #tpu.memory_space<vmem>>, %arg13: memref<1x128xf32, #tpu.memory_space<vmem>>, %arg14: memref<1x1xf32, #tpu.memory_space<vmem>>, %arg15: memref<128x1xf32, #tpu.memory_space<vmem>>) attributes {dimension_semantics = [#tpu.dimension_semantics<parallel>], iteration_bounds = array<i64: 1>, scalar_prefetch = 0 : i64, scratch_operands = 0 : i64, tpu.core_type = #tpu.core_type<tc>, window_params = [{transform_indices = @transform_0, window_bounds = array<i64: 256, 128>}, {pipeline_mode = #tpu.pipeline_mode<synchronous>, transform_indices = @transform_1, window_bounds = array<i64: 128, 256>}, {pipeline_mode = #tpu.pipeline_mode<synchronous>, transform_indices = @transform_2, window_bounds = array<i64: 1, 256>}, {pipeline_mode = #tpu.pipeline_mode<synchronous>, transform_indices = @transform_3, window_bounds = array<i64: 256, 256>}, {pipeline_mode = #tpu.pipeline_mode<synchronous>, transform_indices = @transform_4, window_bounds = array<i64: 1, 256>}, {pipeline_mode = #tpu.pipeline_mode<synchronous>, transform_indices = @transform_5, window_bounds = array<i64: 256, 256>}, {pipeline_mode = #tpu.pipeline_mode<synchronous>, transform_indices = @transform_6, window_bounds = array<i64: 1, 256>}, {pipeline_mode = #tpu.pipeline_mode<synchronous>, transform_indices = @transform_7, window_bounds = array<i64: 256, 128>}, {pipeline_mode = #tpu.pipeline_mode<synchronous>, transform_indices = @transform_8, window_bounds = array<i64: 1, 128>}, {pipeline_mode = #tpu.pipeline_mode<synchronous>, transform_indices = @transform_9, window_bounds = array<i64: 128, 128>}, {pipeline_mode = #tpu.pipeline_mode<synchronous>, transform_indices = @transform_10, window_bounds = array<i64: 1, 128>}, {pipeline_mode = #tpu.pipeline_mode<synchronous>, transform_indices = @transform_11, window_bounds = array<i64: 1, 128>}, {pipeline_mode = #tpu.pipeline_mode<synchronous>, transform_indices = @transform_12, window_bounds = array<i64: 1, 128>}, {pipeline_mode = #tpu.pipeline_mode<synchronous>, transform_indices = @transform_13, window_bounds = array<i64: 1, 1>}, {transform_indices = @transform_14, window_bounds = array<i64: 128, 1>}]} {
    %c0 = arith.constant 0 : index
    %c0_0 = arith.constant 0 : index
    %0 = vector.load %arg1[%c0, %c0_0] : memref<256x128xbf16, #tpu.memory_space<vmem>>, vector<256x128xbf16>
    %c0_1 = arith.constant 0 : index
    %c0_2 = arith.constant 0 : index
    %1 = vector.load %arg2[%c0_1, %c0_2] : memref<128x256xbf16, #tpu.memory_space<vmem>>, vector<128x256xbf16>
    %cst = arith.constant dense<0.000000e+00> : vector<256x256xf32>
    %2 = tpu.matmul %0, %1, %cst {dimension_numbers = #tpu.dot_dimension_numbers<[1], [0], [0], [1], [0, 0, 1, 1], [], []>} : vector<256x128xbf16>, vector<128x256xbf16>, vector<256x256xf32> -> vector<256x256xf32>
    %c0_3 = arith.constant 0 : index
    %c0_4 = arith.constant 0 : index
    %3 = vector.load %arg3[%c0_3, %c0_4] : memref<1x256xf32, #tpu.memory_space<vmem>>, vector<1x256xf32>
    %4 = vector.broadcast %3 : vector<1x256xf32> to vector<256x256xf32>
    %5 = arith.addf %2, %4 : vector<256x256xf32>
    %cst_5 = arith.constant 0.000000e+00 : f32
    %6 = vector.broadcast %cst_5 : f32 to vector<256x256xf32>
    %7 = arith.maximumf %5, %6 : vector<256x256xf32>
    %8 = arith.truncf %7 : vector<256x256xf32> to vector<256x256xbf16>
    %c0_6 = arith.constant 0 : index
    %c0_7 = arith.constant 0 : index
    %9 = vector.load %arg4[%c0_6, %c0_7] : memref<256x256xbf16, #tpu.memory_space<vmem>>, vector<256x256xbf16>
    %cst_8 = arith.constant dense<0.000000e+00> : vector<256x256xf32>
    %10 = tpu.matmul %8, %9, %cst_8 {dimension_numbers = #tpu.dot_dimension_numbers<[1], [0], [0], [1], [0, 0, 1, 1], [], []>} : vector<256x256xbf16>, vector<256x256xbf16>, vector<256x256xf32> -> vector<256x256xf32>
    %c0_9 = arith.constant 0 : index
    %c0_10 = arith.constant 0 : index
    %11 = vector.load %arg5[%c0_9, %c0_10] : memref<1x256xf32, #tpu.memory_space<vmem>>, vector<1x256xf32>
    %12 = vector.broadcast %11 : vector<1x256xf32> to vector<256x256xf32>
    %13 = arith.addf %10, %12 : vector<256x256xf32>
    %cst_11 = arith.constant 0.000000e+00 : f32
    %14 = vector.broadcast %cst_11 : f32 to vector<256x256xf32>
    %15 = arith.maximumf %13, %14 : vector<256x256xf32>
    %16 = arith.truncf %15 : vector<256x256xf32> to vector<256x256xbf16>
    %c0_12 = arith.constant 0 : index
    %c0_13 = arith.constant 0 : index
    %17 = vector.load %arg6[%c0_12, %c0_13] : memref<256x256xbf16, #tpu.memory_space<vmem>>, vector<256x256xbf16>
    %cst_14 = arith.constant dense<0.000000e+00> : vector<256x256xf32>
    %18 = tpu.matmul %16, %17, %cst_14 {dimension_numbers = #tpu.dot_dimension_numbers<[1], [0], [0], [1], [0, 0, 1, 1], [], []>} : vector<256x256xbf16>, vector<256x256xbf16>, vector<256x256xf32> -> vector<256x256xf32>
    %c0_15 = arith.constant 0 : index
    %c0_16 = arith.constant 0 : index
    %19 = vector.load %arg7[%c0_15, %c0_16] : memref<1x256xf32, #tpu.memory_space<vmem>>, vector<1x256xf32>
    %20 = vector.broadcast %19 : vector<1x256xf32> to vector<256x256xf32>
    %21 = arith.addf %18, %20 : vector<256x256xf32>
    %cst_17 = arith.constant 0.000000e+00 : f32
    %22 = vector.broadcast %cst_17 : f32 to vector<256x256xf32>
    %23 = arith.maximumf %21, %22 : vector<256x256xf32>
    %24 = arith.truncf %23 : vector<256x256xf32> to vector<256x256xbf16>
    %c0_18 = arith.constant 0 : index
    %c0_19 = arith.constant 0 : index
    %25 = vector.load %arg8[%c0_18, %c0_19] : memref<256x128xbf16, #tpu.memory_space<vmem>>, vector<256x128xbf16>
    %cst_20 = arith.constant dense<0.000000e+00> : vector<256x128xf32>
    %26 = tpu.matmul %24, %25, %cst_20 {dimension_numbers = #tpu.dot_dimension_numbers<[1], [0], [0], [1], [0, 0, 1, 1], [], []>} : vector<256x256xbf16>, vector<256x128xbf16>, vector<256x128xf32> -> vector<256x128xf32>
    %c0_21 = arith.constant 0 : index
    %c0_22 = arith.constant 0 : index
    %27 = vector.load %arg9[%c0_21, %c0_22] : memref<1x128xf32, #tpu.memory_space<vmem>>, vector<1x128xf32>
    %28 = vector.broadcast %27 : vector<1x128xf32> to vector<256x128xf32>
    %29 = arith.addf %26, %28 : vector<256x128xf32>
    %cst_23 = arith.constant 0.000000e+00 : f32
    %30 = vector.broadcast %cst_23 : f32 to vector<256x128xf32>
    %31 = arith.maximumf %29, %30 : vector<256x128xf32>
    %32 = arith.truncf %31 : vector<256x128xf32> to vector<256x128xbf16>
    %c0_24 = arith.constant 0 : index
    %c0_25 = arith.constant 0 : index
    %33 = vector.load %arg10[%c0_24, %c0_25] : memref<128x128xbf16, #tpu.memory_space<vmem>>, vector<128x128xbf16>
    %cst_26 = arith.constant dense<0.000000e+00> : vector<256x128xf32>
    %34 = tpu.matmul %32, %33, %cst_26 {dimension_numbers = #tpu.dot_dimension_numbers<[1], [0], [0], [1], [0, 0, 1, 1], [], []>} : vector<256x128xbf16>, vector<128x128xbf16>, vector<256x128xf32> -> vector<256x128xf32>
    %c0_27 = arith.constant 0 : index
    %c0_28 = arith.constant 0 : index
    %35 = vector.load %arg11[%c0_27, %c0_28] : memref<1x128xf32, #tpu.memory_space<vmem>>, vector<1x128xf32>
    %36 = vector.broadcast %35 : vector<1x128xf32> to vector<256x128xf32>
    %37 = arith.addf %34, %36 : vector<256x128xf32>
    %cst_29 = arith.constant 0.000000e+00 : f32
    %38 = vector.broadcast %cst_29 : f32 to vector<256x128xf32>
    %39 = arith.maximumf %37, %38 : vector<256x128xf32>
    %40 = vector.extract_strided_slice %39 {offsets = [0, 0], sizes = [128, 128], strides = [1, 1]} : vector<256x128xf32> to vector<128x128xf32>
    %41 = vector.extract_strided_slice %39 {offsets = [128, 0], sizes = [128, 128], strides = [1, 1]} : vector<256x128xf32> to vector<128x128xf32>
    %c0_30 = arith.constant 0 : index
    %c0_31 = arith.constant 0 : index
    %42 = vector.load %arg12[%c0_30, %c0_31] : memref<1x128xf32, #tpu.memory_space<vmem>>, vector<1x128xf32>
    %43 = vector.broadcast %42 : vector<1x128xf32> to vector<128x128xf32>
    %44 = arith.mulf %40, %43 : vector<128x128xf32>
    %c0_32 = arith.constant 0 : index
    %c0_33 = arith.constant 0 : index
    %45 = vector.load %arg13[%c0_32, %c0_33] : memref<1x128xf32, #tpu.memory_space<vmem>>, vector<1x128xf32>
    %46 = vector.broadcast %45 : vector<1x128xf32> to vector<128x128xf32>
    %47 = arith.mulf %41, %46 : vector<128x128xf32>
    %48 = arith.addf %44, %47 : vector<128x128xf32>
    %cst_34 = arith.constant dense<0.000000e+00> : vector<128xf32>
    %49 = vector.multi_reduction <add>, %48, %cst_34 [1] : vector<128x128xf32> to vector<128xf32>
    %50 = vector.shape_cast %49 : vector<128xf32> to vector<128x1xf32>
    %c0_35 = arith.constant 0 : index
    %c0_36 = arith.constant 0 : index
    %51 = vector.load %arg14[%c0_35, %c0_36] : memref<1x1xf32, #tpu.memory_space<vmem>>, vector<1x1xf32>
    %52 = vector.broadcast %51 : vector<1x1xf32> to vector<128x1xf32>
    %53 = arith.addf %50, %52 : vector<128x1xf32>
    %c0_37 = arith.constant 0 : index
    %c0_38 = arith.constant 0 : index
    %54 = vector.load %arg15[%c0_37, %c0_38] : memref<128x1xf32, #tpu.memory_space<vmem>>, vector<128x1xf32>
    tpu.vector_store %arg15[%c0_37, %c0_38], %53 {strides = array<i32>} : memref<128x1xf32, #tpu.memory_space<vmem>>, vector<128x1xf32>,
    return
  }
  func.func @transform_0(%arg0: i32) -> (i32, i32) {
    %c0_i32 = arith.constant 0 : i32
    %c0_i32_0 = arith.constant 0 : i32
    return %arg0, %c0_i32 : i32, i32
  }
  func.func @transform_1(%arg0: i32) -> (i32, i32) {
    %c0_i32 = arith.constant 0 : i32
    %c0_i32_0 = arith.constant 0 : i32
    %c0_i32_1 = arith.constant 0 : i32
    return %c0_i32, %c0_i32_0 : i32, i32
  }
  func.func @transform_2(%arg0: i32) -> (i32, i32) {
    %c0_i32 = arith.constant 0 : i32
    %c0_i32_0 = arith.constant 0 : i32
    %c0_i32_1 = arith.constant 0 : i32
    return %c0_i32, %c0_i32_0 : i32, i32
  }
  func.func @transform_3(%arg0: i32) -> (i32, i32) {
    %c0_i32 = arith.constant 0 : i32
    %c0_i32_0 = arith.constant 0 : i32
    %c0_i32_1 = arith.constant 0 : i32
    return %c0_i32, %c0_i32_0 : i32, i32
  }
  func.func @transform_4(%arg0: i32) -> (i32, i32) {
    %c0_i32 = arith.constant 0 : i32
    %c0_i32_0 = arith.constant 0 : i32
    %c0_i32_1 = arith.constant 0 : i32
    return %c0_i32, %c0_i32_0 : i32, i32
  }
  func.func @transform_5(%arg0: i32) -> (i32, i32) {
    %c0_i32 = arith.constant 0 : i32
    %c0_i32_0 = arith.constant 0 : i32
    %c0_i32_1 = arith.constant 0 : i32
    return %c0_i32, %c0_i32_0 : i32, i32
  }
  func.func @transform_6(%arg0: i32) -> (i32, i32) {
    %c0_i32 = arith.constant 0 : i32
    %c0_i32_0 = arith.constant 0 : i32
    %c0_i32_1 = arith.constant 0 : i32
    return %c0_i32, %c0_i32_0 : i32, i32
  }
  func.func @transform_7(%arg0: i32) -> (i32, i32) {
    %c0_i32 = arith.constant 0 : i32
    %c0_i32_0 = arith.constant 0 : i32
    %c0_i32_1 = arith.constant 0 : i32
    return %c0_i32, %c0_i32_0 : i32, i32
  }
  func.func @transform_8(%arg0: i32) -> (i32, i32) {
    %c0_i32 = arith.constant 0 : i32
    %c0_i32_0 = arith.constant 0 : i32
    %c0_i32_1 = arith.constant 0 : i32
    return %c0_i32, %c0_i32_0 : i32, i32
  }
  func.func @transform_9(%arg0: i32) -> (i32, i32) {
    %c0_i32 = arith.constant 0 : i32
    %c0_i32_0 = arith.constant 0 : i32
    %c0_i32_1 = arith.constant 0 : i32
    return %c0_i32, %c0_i32_0 : i32, i32
  }
  func.func @transform_10(%arg0: i32) -> (i32, i32) {
    %c0_i32 = arith.constant 0 : i32
    %c0_i32_0 = arith.constant 0 : i32
    %c0_i32_1 = arith.constant 0 : i32
    return %c0_i32, %c0_i32_0 : i32, i32
  }
  func.func @transform_11(%arg0: i32) -> (i32, i32) {
    %c0_i32 = arith.constant 0 : i32
    %c0_i32_0 = arith.constant 0 : i32
    %c0_i32_1 = arith.constant 0 : i32
    return %c0_i32, %c0_i32_0 : i32, i32
  }
  func.func @transform_12(%arg0: i32) -> (i32, i32) {
    %c0_i32 = arith.constant 0 : i32
    %c0_i32_0 = arith.constant 0 : i32
    %c0_i32_1 = arith.constant 0 : i32
    return %c0_i32, %c0_i32_0 : i32, i32
  }
  func.func @transform_13(%arg0: i32) -> (i32, i32) {
    %c0_i32 = arith.constant 0 : i32
    %c0_i32_0 = arith.constant 0 : i32
    %c0_i32_1 = arith.constant 0 : i32
    return %c0_i32, %c0_i32_0 : i32, i32
  }
  func.func @transform_14(%arg0: i32) -> (i32, i32) {
    %c0_i32 = arith.constant 0 : i32
    %c0_i32_0 = arith.constant 0 : i32
    return %arg0, %c0_i32 : i32, i32
  }
}

</mosaic_0001>

<llo_original>
// kernel: global_metric_linear.1
$region0: #{global_metric_linear.1}
  #allocation0 [shape = 'u32[]', space=smem, size = 0x4, offset = 0x4, fixed_abs, tag = 'smem constant byte address 0x4 - core index']
  #allocation1 [shape = 'u32[144,128]{1,0:T(1,128)}', space=vmem, size = 0x12000, scoped, tag = 'internal scratch']
  #allocation2 [shape = 'f32[1,1]{1,0:T(1,128)S(1)}', space=vmem, size = 0x200, scoped, tag = 'scoped memory for global_metric_linear.1']
  %s0 = inlined_call_operand.vmem [shape: bf16[256,128], index: 0, kind: input, shape index: {}]
  %s1 = inlined_call_operand.vmem [shape: bf16[128,256], index: 1, kind: input, shape index: {}]
  %s2 = inlined_call_operand.vmem [shape: f32[1,256], index: 2, kind: input, shape index: {}]
  %s3 = inlined_call_operand.vmem [shape: bf16[256,256], index: 3, kind: input, shape index: {}]
  %s4 = inlined_call_operand.vmem [shape: f32[1,256], index: 4, kind: input, shape index: {}]
  %s5 = inlined_call_operand.vmem [shape: bf16[256,256], index: 5, kind: input, shape index: {}]
  %s6 = inlined_call_operand.vmem [shape: f32[1,256], index: 6, kind: input, shape index: {}]
  %s7 = inlined_call_operand.vmem [shape: bf16[256,128], index: 7, kind: input, shape index: {}]
  %s8 = inlined_call_operand.vmem [shape: f32[1,128], index: 8, kind: input, shape index: {}]
  %s9 = inlined_call_operand.vmem [shape: bf16[128,128], index: 9, kind: input, shape index: {}]
  %s10 = inlined_call_operand.vmem [shape: f32[1,128], index: 10, kind: input, shape index: {}]
  %s11 = inlined_call_operand.vmem [shape: f32[1,128], index: 11, kind: input, shape index: {}]
  %s12 = inlined_call_operand.vmem [shape: f32[1,128], index: 12, kind: input, shape index: {}]
  %s13 = inlined_call_operand.<no memory space> [shape: f32[1,1], index: 13, kind: input, shape index: {}]
  %s14 = inlined_call_operand.vmem [shape: f32[128,1], index: 14, kind: output, shape index: {}]
  %s15 = sld [smem:[#allocation0]]
  $region66: #{global_metric_linear.1} parent=0
    _
  %s17 = ssub.s32 1, %s15
  %s18 = scalar_select 0, %s17, %s15
  %v19 = vstv %s13
  %20 = vst [vmem:[#allocation2] sm:$0x1] %v19
  // Predicated region
  $region2: #{global_metric_linear.1} parent=0 // pred_check
    _
  $region3: #{global_metric_linear.1} parent=0 // pred_check_branch
    %22 = sbr.rel (0) target = $region5
  $region4: #{global_metric_linear.1} parent=0 // pred_region
    _
  $region5: #{global_metric_linear.1} parent=0 // pred_fallthru
    _
  // Predicated region
  $region6: #{global_metric_linear.1} parent=0 // pred_check
    _
  $region7: #{global_metric_linear.1} parent=0 // pred_check_branch
    %24 = sbr.rel (0) target = $region9
  $region8: #{global_metric_linear.1} parent=0 // pred_region
    _
  $region9: #{global_metric_linear.1} parent=0 // pred_fallthru
    _
  // Predicated region
  $region10: #{global_metric_linear.1} parent=0 // pred_check
    _
  $region11: #{global_metric_linear.1} parent=0 // pred_check_branch
    %26 = sbr.rel (0) target = $region13
  $region12: #{global_metric_linear.1} parent=0 // pred_region
    _
  $region13: #{global_metric_linear.1} parent=0 // pred_fallthru
    _
  // Predicated region
  $region14: #{global_metric_linear.1} parent=0 // pred_check
    _
  $region15: #{global_metric_linear.1} parent=0 // pred_check_branch
    %28 = sbr.rel (0) target = $region17
  $region16: #{global_metric_linear.1} parent=0 // pred_region
    _
  $region17: #{global_metric_linear.1} parent=0 // pred_fallthru
    _
  // Predicated region
  $region18: #{global_metric_linear.1} parent=0 // pred_check
    _
  $region19: #{global_metric_linear.1} parent=0 // pred_check_branch
    %30 = sbr.rel (0) target = $region21
  $region20: #{global_metric_linear.1} parent=0 // pred_region
    _
  $region21: #{global_metric_linear.1} parent=0 // pred_fallthru
    _
  // Predicated region
  $region22: #{global_metric_linear.1} parent=0 // pred_check
    _
  $region23: #{global_metric_linear.1} parent=0 // pred_check_branch
    %32 = sbr.rel (0) target = $region25
  $region24: #{global_metric_linear.1} parent=0 // pred_region
    _
  $region25: #{global_metric_linear.1} parent=0 // pred_fallthru
    _
  // Predicated region
  $region26: #{global_metric_linear.1} parent=0 // pred_check
    _
  $region27: #{global_metric_linear.1} parent=0 // pred_check_branch
    %34 = sbr.rel (0) target = $region29
  $region28: #{global_metric_linear.1} parent=0 // pred_region
    _
  $region29: #{global_metric_linear.1} parent=0 // pred_fallthru
    _
  // Predicated region
  $region30: #{global_metric_linear.1} parent=0 // pred_check
    _
  $region31: #{global_metric_linear.1} parent=0 // pred_check_branch
    %36 = sbr.rel (0) target = $region33
  $region32: #{global_metric_linear.1} parent=0 // pred_region
    _
  $region33: #{global_metric_linear.1} parent=0 // pred_fallthru
    _
  // Predicated region
  $region34: #{global_metric_linear.1} parent=0 // pred_check
    _
  $region35: #{global_metric_linear.1} parent=0 // pred_check_branch
    %38 = sbr.rel (0) target = $region37
  $region36: #{global_metric_linear.1} parent=0 // pred_region
    _
  $region37: #{global_metric_linear.1} parent=0 // pred_fallthru
    _
  // Predicated region
  $region38: #{global_metric_linear.1} parent=0 // pred_check
    _
  $region39: #{global_metric_linear.1} parent=0 // pred_check_branch
    %40 = sbr.rel (0) target = $region41
  $region40: #{global_metric_linear.1} parent=0 // pred_region
    _
  $region41: #{global_metric_linear.1} parent=0 // pred_fallthru
    _
  // Predicated region
  $region42: #{global_metric_linear.1} parent=0 // pred_check
    _
  $region43: #{global_metric_linear.1} parent=0 // pred_check_branch
    %42 = sbr.rel (0) target = $region45
  $region44: #{global_metric_linear.1} parent=0 // pred_region
    _
  $region45: #{global_metric_linear.1} parent=0 // pred_fallthru
    _
  // Predicated region
  $region46: #{global_metric_linear.1} parent=0 // pred_check
    _
  $region47: #{global_metric_linear.1} parent=0 // pred_check_branch
    %44 = sbr.rel (0) target = $region49
  $region48: #{global_metric_linear.1} parent=0 // pred_region
    _
  $region49: #{global_metric_linear.1} parent=0 // pred_fallthru
    _
  // Predicated region
  $region50: #{global_metric_linear.1} parent=0 // pred_check
    _
  $region51: #{global_metric_linear.1} parent=0 // pred_check_branch
    %46 = sbr.rel (0) target = $region53
  $region52: #{global_metric_linear.1} parent=0 // pred_region
    _
  $region53: #{global_metric_linear.1} parent=0 // pred_fallthru
    _
  // Predicated region
  $region54: #{global_metric_linear.1} parent=0 // pred_check
    _
  $region55: #{global_metric_linear.1} parent=0 // pred_check_branch
    %48 = sbr.rel (0) target = $region57
  $region56: #{global_metric_linear.1} parent=0 // pred_region
    _
  $region57: #{global_metric_linear.1} parent=0 // pred_fallthru
    _
  %v50 = vld [vmem:[%s0] sm:$0xf]
  %v51 = vld [vmem:[%s0 + $0x4] sm:$0xf]
  %v52 = vld [vmem:[%s0 + $0x8] sm:$0xf]
  %v53 = vld [vmem:[%s0 + $0xc] sm:$0xf]
  %v54 = vld [vmem:[%s0 + $0x10] sm:$0xf]
  %v55 = vld [vmem:[%s0 + $0x14] sm:$0xf]
  %v56 = vld [vmem:[%s0 + $0x18] sm:$0xf]
  %v57 = vld [vmem:[%s0 + $0x1c] sm:$0xf]
  %v58 = vld [vmem:[%s0 + $0x20] sm:$0xf]
  %v59 = vld [vmem:[%s0 + $0x24] sm:$0xf]
  %v60 = vld [vmem:[%s0 + $0x28] sm:$0xf]
  %v61 = vld [vmem:[%s0 + $0x2c] sm:$0xf]
  %v62 = vld [vmem:[%s0 + $0x30] sm:$0xf]
  %v63 = vld [vmem:[%s0 + $0x34] sm:$0xf]
  %v64 = vld [vmem:[%s0 + $0x38] sm:$0xf]
  %v65 = vld [vmem:[%s0 + $0x3c] sm:$0xf]
  %v66 = vld [vmem:[%s0 + $0x40] sm:$0xf]
  %v67 = vld [vmem:[%s0 + $0x44] sm:$0xf]
  %v68 = vld [vmem:[%s0 + $0x48] sm:$0xf]
  %v69 = vld [vmem:[%s0 + $0x4c] sm:$0xf]
  %v70 = vld [vmem:[%s0 + $0x50] sm:$0xf]
  %v71 = vld [vmem:[%s0 + $0x54] sm:$0xf]
  %v72 = vld [vmem:[%s0 + $0x58] sm:$0xf]
  %v73 = vld [vmem:[%s0 + $0x5c] sm:$0xf]
  %v74 = vld [vmem:[%s0 + $0x60] sm:$0xf]
  %v75 = vld [vmem:[%s0 + $0x64] sm:$0xf]
  %v76 = vld [vmem:[%s0 + $0x68] sm:$0xf]
  %v77 = vld [vmem:[%s0 + $0x6c] sm:$0xf]
  %v78 = vld [vmem:[%s0 + $0x70] sm:$0xf]
  %v79 = vld [vmem:[%s0 + $0x74] sm:$0xf]
  %v80 = vld [vmem:[%s0 + $0x78] sm:$0xf]
  %v81 = vld [vmem:[%s0 + $0x7c] sm:$0xf]
  %v82 = vld [vmem:[%s1] sm:$0xff]
  %v83 = vld [vmem:[%s1 + $0x8] sm:$0xff]
  %v84 = vld [vmem:[%s1 + $0x10] sm:$0xff]
  %v85 = vld [vmem:[%s1 + $0x18] sm:$0xff]
  %v86 = vld [vmem:[%s1 + $0x20] sm:$0xff]
  %v87 = vld [vmem:[%s1 + $0x28] sm:$0xff]
  %v88 = vld [vmem:[%s1 + $0x30] sm:$0xff]
  %v89 = vld [vmem:[%s1 + $0x38] sm:$0xff]
  %v90 = vld [vmem:[%s1 + $0x40] sm:$0xff]
  %v91 = vld [vmem:[%s1 + $0x48] sm:$0xff]
  %v92 = vld [vmem:[%s1 + $0x50] sm:$0xff]
  %v93 = vld [vmem:[%s1 + $0x58] sm:$0xff]
  %v94 = vld [vmem:[%s1 + $0x60] sm:$0xff]
  %v95 = vld [vmem:[%s1 + $0x68] sm:$0xff]
  %v96 = vld [vmem:[%s1 + $0x70] sm:$0xff]
  %v97 = vld [vmem:[%s1 + $0x78] sm:$0xff]
  %v98 = vld [vmem:[%s2] sm:$0x3]
  %v100 = vlaneseq
  %v101 = vshrl.u32 %v100, 7
  %v102 = vsub.s32 0, %v101
  %v103 = vrot.slane %v98, %v102
  %v104 = vlaneseq
  %v105 = vshrl.u32 %v104, 7
  %v106 = vsub.s32 1, %v105
  %v107 = vrot.slane %v98, %v106
  %v142 = vunpack.c.l.b16 %v50
  %v143 = vunpack.c.l.b16 %v51
  %v144 = vunpack.c.l.b16 %v52
  %v145 = vunpack.c.l.b16 %v53
  %v146 = vunpack.c.l.b16 %v54
  %v147 = vunpack.c.l.b16 %v55
  %v148 = vunpack.c.l.b16 %v56
  %v149 = vunpack.c.l.b16 %v57
  %v150 = vunpack.c.l.b16 %v58
  %v151 = vunpack.c.l.b16 %v59
  %v152 = vunpack.c.l.b16 %v60
  %v153 = vunpack.c.l.b16 %v61
  %v154 = vunpack.c.l.b16 %v62
  %v155 = vunpack.c.l.b16 %v63
  %v156 = vunpack.c.l.b16 %v64
  %v157 = vunpack.c.l.b16 %v65
  %v158 = vunpack.c.l.b16 %v66
  %v159 = vunpack.c.l.b16 %v67
  %v160 = vunpack.c.l.b16 %v68
  %v161 = vunpack.c.l.b16 %v69
  %v162 = vunpack.c.l.b16 %v70
  %v163 = vunpack.c.l.b16 %v71
  %v164 = vunpack.c.l.b16 %v72
  %v165 = vunpack.c.l.b16 %v73
  %v166 = vunpack.c.l.b16 %v74
  %v167 = vunpack.c.l.b16 %v75
  %v168 = vunpack.c.l.b16 %v76
  %v169 = vunpack.c.l.b16 %v77
  %v170 = vunpack.c.l.b16 %v78
  %v171 = vunpack.c.l.b16 %v79
  %v172 = vunpack.c.l.b16 %v80
  %v173 = vunpack.c.l.b16 %v81
  %v174 = vpack.c.b16 %v143, %v142
  %v175 = vpack.c.b16 %v145, %v144
  %v176 = vpack.c.b16 %v147, %v146
  %v177 = vpack.c.b16 %v149, %v148
  %v178 = vpack.c.b16 %v151, %v150
  %v179 = vpack.c.b16 %v153, %v152
  %v180 = vpack.c.b16 %v155, %v154
  %v181 = vpack.c.b16 %v157, %v156
  %v182 = vpack.c.b16 %v159, %v158
  %v183 = vpack.c.b16 %v161, %v160
  %v184 = vpack.c.b16 %v163, %v162
  %v185 = vpack.c.b16 %v165, %v164
  %v186 = vpack.c.b16 %v167, %v166
  %v187 = vpack.c.b16 %v169, %v168
  %v188 = vpack.c.b16 %v171, %v170
  %v189 = vpack.c.b16 %v173, %v172
  %v222 = vunpack.c.l.b16 %v82
  %v223 = vunpack.c.h.b16 %v82
  %v224 = vunpack.c.l.b16 %v83
  %v225 = vunpack.c.h.b16 %v83
  %v226 = vunpack.c.l.b16 %v84
  %v227 = vunpack.c.h.b16 %v84
  %v228 = vunpack.c.l.b16 %v85
  %v229 = vunpack.c.h.b16 %v85
  %v230 = vunpack.c.l.b16 %v86
  %v231 = vunpack.c.h.b16 %v86
  %v232 = vunpack.c.l.b16 %v87
  %v233 = vunpack.c.h.b16 %v87
  %v234 = vunpack.c.l.b16 %v88
  %v235 = vunpack.c.h.b16 %v88
  %v236 = vunpack.c.l.b16 %v89
  %v237 = vunpack.c.h.b16 %v89
  %v238 = vunpack.c.l.b16 %v90
  %v239 = vunpack.c.h.b16 %v90
  %v240 = vunpack.c.l.b16 %v91
  %v241 = vunpack.c.h.b16 %v91
  %v242 = vunpack.c.l.b16 %v92
  %v243 = vunpack.c.h.b16 %v92
  %v244 = vunpack.c.l.b16 %v93
  %v245 = vunpack.c.h.b16 %v93
  %v246 = vunpack.c.l.b16 %v94
  %v247 = vunpack.c.h.b16 %v94
  %v248 = vunpack.c.l.b16 %v95
  %v249 = vunpack.c.h.b16 %v95
  %v250 = vunpack.c.l.b16 %v96
  %v251 = vunpack.c.h.b16 %v96
  %v252 = vunpack.c.l.b16 %v97
  %v253 = vunpack.c.h.b16 %v97
  %v254 = vpack.c.b16 %v224, %v222
  %v255 = vpack.c.b16 %v225, %v223
  %v256 = vpack.c.b16 %v228, %v226
  %v257 = vpack.c.b16 %v229, %v227
  %v258 = vpack.c.b16 %v232, %v230
  %v259 = vpack.c.b16 %v233, %v231
  %v260 = vpack.c.b16 %v236, %v234
  %v261 = vpack.c.b16 %v237, %v235
  %v262 = vpack.c.b16 %v240, %v238
  %v263 = vpack.c.b16 %v241, %v239
  %v264 = vpack.c.b16 %v244, %v242
  %v265 = vpack.c.b16 %v245, %v243
  %v266 = vpack.c.b16 %v248, %v246
  %v267 = vpack.c.b16 %v249, %v247
  %v268 = vpack.c.b16 %v252, %v250
  %v269 = vpack.c.b16 %v253, %v251
  %286 = vmatprep.subr.bf16.mxu0 %v255
  %287 = vmatpush1.bf16.msra.mxu0 %v254
  %288 = vmatprep.subr.bf16.mxu0 %v257
  %289 = vmatpush1.bf16.msra.mxu0 %v256
  %290 = vmatprep.subr.bf16.mxu0 %v259
  %291 = vmatpush1.bf16.msra.mxu0 %v258
  %292 = vmatprep.subr.bf16.mxu0 %v261
  %293 = vmatpush1.bf16.msra.mxu0 %v260
  %294 = vmatprep.subr.bf16.mxu0 %v263
  %295 = vmatpush1.bf16.msra.mxu0 %v262
  %296 = vmatprep.subr.bf16.mxu0 %v265
  %297 = vmatpush1.bf16.msra.mxu0 %v264
  %298 = vmatprep.subr.bf16.mxu0 %v267
  %299 = vmatpush1.bf16.msra.mxu0 %v266
  %300 = vmatprep.subr.bf16.mxu0 %v269
  %301 = vmatpush1.bf16.msra.mxu0 %v268
  %302 = vmatprep.subr.bf16.mxu0 0
  %303 = vmatpush1.bf16.msra.mxu0 0
  %304 = vmatprep.subr.bf16.mxu0 0
  %305 = vmatpush1.bf16.msra.mxu0 0
  %306 = vmatprep.subr.bf16.mxu0 0
  %307 = vmatpush1.bf16.msra.mxu0 0
  %308 = vmatprep.subr.bf16.mxu0 0
  %309 = vmatpush1.bf16.msra.mxu0 0
  %310 = vmatprep.subr.bf16.mxu0 0
  %311 = vmatpush1.bf16.msra.mxu0 0
  %312 = vmatprep.subr.bf16.mxu0 0
  %313 = vmatpush1.bf16.msra.mxu0 0
  %314 = vmatprep.subr.bf16.mxu0 0
  %315 = vmatpush1.bf16.msra.mxu0 0
  %316 = vmatprep.subr.bf16.mxu0 0
  %317 = vmatpush1.bf16.msra.mxu0 0
  %318 = vmatprep.mubr.bf16.mxu0 0
  %319 = vmatmul.mubr.bf16.gmra.mrb[0].mxu0 %v174
  %v320 = vpop.f32.mrb[0].mxu0
  %v321 = vadd.f32 %v103, %v320
  %v322 = vpop.f32.mrb[0].mxu0
  %v323 = vadd.f32 %v107, %v322
  %v324 = vpop.f32.mrb[0].mxu0
  %v325 = vadd.f32 %v103, %v324
  %v326 = vpop.f32.mrb[0].mxu0
  %v327 = vadd.f32 %v107, %v326
  %328 = vmatprep.mubr.bf16.mxu0 0
  %329 = vmatmul.mubr.bf16.gmra.mrb[0].mxu0 %v175
  %v330 = vpop.f32.mrb[0].mxu0
  %v331 = vadd.f32 %v103, %v330
  %v332 = vpop.f32.mrb[0].mxu0
  %v333 = vadd.f32 %v107, %v332
  %v334 = vpop.f32.mrb[0].mxu0
  %v335 = vadd.f32 %v103, %v334
  %v336 = vpop.f32.mrb[0].mxu0
  %v337 = vadd.f32 %v107, %v336
  %338 = vmatprep.mubr.bf16.mxu0 0
  %339 = vmatmul.mubr.bf16.gmra.mrb[0].mxu0 %v176
  %v340 = vpop.f32.mrb[0].mxu0
  %v341 = vadd.f32 %v103, %v340
  %v342 = vpop.f32.mrb[0].mxu0
  %v343 = vadd.f32 %v107, %v342
  %v344 = vpop.f32.mrb[0].mxu0
  %v345 = vadd.f32 %v103, %v344
  %v346 = vpop.f32.mrb[0].mxu0
  %v347 = vadd.f32 %v107, %v346
  %348 = vmatprep.mubr.bf16.mxu0 0
  %349 = vmatmul.mubr.bf16.gmra.mrb[0].mxu0 %v177
  %v350 = vpop.f32.mrb[0].mxu0
  %v351 = vadd.f32 %v103, %v350
  %v352 = vpop.f32.mrb[0].mxu0
  %v353 = vadd.f32 %v107, %v352
  %v354 = vpop.f32.mrb[0].mxu0
  %v355 = vadd.f32 %v103, %v354
  %v356 = vpop.f32.mrb[0].mxu0
  %v357 = vadd.f32 %v107, %v356
  %358 = vmatprep.mubr.bf16.mxu0 0
  %359 = vmatmul.mubr.bf16.gmra.mrb[0].mxu0 %v178
  %v360 = vpop.f32.mrb[0].mxu0
  %v361 = vadd.f32 %v103, %v360
  %v362 = vpop.f32.mrb[0].mxu0
  %v363 = vadd.f32 %v107, %v362
  %v364 = vpop.f32.mrb[0].mxu0
  %v365 = vadd.f32 %v103, %v364
  %v366 = vpop.f32.mrb[0].mxu0
  %v367 = vadd.f32 %v107, %v366
  %368 = vmatprep.mubr.bf16.mxu0 0
  %369 = vmatmul.mubr.bf16.gmra.mrb[0].mxu0 %v179
  %v370 = vpop.f32.mrb[0].mxu0
  %v371 = vadd.f32 %v103, %v370
  %v372 = vpop.f32.mrb[0].mxu0
  %v373 = vadd.f32 %v107, %v372
  %v374 = vpop.f32.mrb[0].mxu0
  %v375 = vadd.f32 %v103, %v374
  %v376 = vpop.f32.mrb[0].mxu0
  %v377 = vadd.f32 %v107, %v376
  %378 = vmatprep.mubr.bf16.mxu0 0
  %379 = vmatmul.mubr.bf16.gmra.mrb[0].mxu0 %v180
  %v380 = vpop.f32.mrb[0].mxu0
  %v381 = vadd.f32 %v103, %v380
  %v382 = vpop.f32.mrb[0].mxu0
  %v383 = vadd.f32 %v107, %v382
  %v384 = vpop.f32.mrb[0].mxu0
  %v385 = vadd.f32 %v103, %v384
  %v386 = vpop.f32.mrb[0].mxu0
  %v387 = vadd.f32 %v107, %v386
  %388 = vmatprep.mubr.bf16.mxu0 0
  %389 = vmatmul.mubr.bf16.gmra.mrb[0].mxu0 %v181
  %v390 = vpop.f32.mrb[0].mxu0
  %v391 = vadd.f32 %v103, %v390
  %v392 = vpop.f32.mrb[0].mxu0
  %v393 = vadd.f32 %v107, %v392
  %v394 = vpop.f32.mrb[0].mxu0
  %v395 = vadd.f32 %v103, %v394
  %v396 = vpop.f32.mrb[0].mxu0
  %v397 = vadd.f32 %v107, %v396
  %398 = vmatprep.mubr.bf16.mxu0 0
  %399 = vmatmul.mubr.bf16.gmra.mrb[0].mxu0 %v182
  %v400 = vpop.f32.mrb[0].mxu0
  %v401 = vadd.f32 %v103, %v400
  %v402 = vpop.f32.mrb[0].mxu0
  %v403 = vadd.f32 %v107, %v402
  %v404 = vpop.f32.mrb[0].mxu0
  %v405 = vadd.f32 %v103, %v404
  %v406 = vpop.f32.mrb[0].mxu0
  %v407 = vadd.f32 %v107, %v406
  %408 = vmatprep.mubr.bf16.mxu0 0
  %409 = vmatmul.mubr.bf16.gmra.mrb[0].mxu0 %v183
  %v410 = vpop.f32.mrb[0].mxu0
  %v411 = vadd.f32 %v103, %v410
  %v412 = vpop.f32.mrb[0].mxu0
  %v413 = vadd.f32 %v107, %v412
  %v414 = vpop.f32.mrb[0].mxu0
  %v415 = vadd.f32 %v103, %v414
  %v416 = vpop.f32.mrb[0].mxu0
  %v417 = vadd.f32 %v107, %v416
  %418 = vmatprep.mubr.bf16.mxu0 0
  %419 = vmatmul.mubr.bf16.gmra.mrb[0].mxu0 %v184
  %v420 = vpop.f32.mrb[0].mxu0
  %v421 = vadd.f32 %v103, %v420
  %v422 = vpop.f32.mrb[0].mxu0
  %v423 = vadd.f32 %v107, %v422
  %v424 = vpop.f32.mrb[0].mxu0
  %v425 = vadd.f32 %v103, %v424
  %v426 = vpop.f32.mrb[0].mxu0
  %v427 = vadd.f32 %v107, %v426
  %428 = vmatprep.mubr.bf16.mxu0 0
  %429 = vmatmul.mubr.bf16.gmra.mrb[0].mxu0 %v185
  %v430 = vpop.f32.mrb[0].mxu0
  %v431 = vadd.f32 %v103, %v430
  %v432 = vpop.f32.mrb[0].mxu0
  %v433 = vadd.f32 %v107, %v432
  %v434 = vpop.f32.mrb[0].mxu0
  %v435 = vadd.f32 %v103, %v434
  %v436 = vpop.f32.mrb[0].mxu0
  %v437 = vadd.f32 %v107, %v436
  %438 = vmatprep.mubr.bf16.mxu0 0
  %439 = vmatmul.mubr.bf16.gmra.mrb[0].mxu0 %v186
  %v440 = vpop.f32.mrb[0].mxu0
  %v441 = vadd.f32 %v103, %v440
  %v442 = vpop.f32.mrb[0].mxu0
  %v443 = vadd.f32 %v107, %v442
  %v444 = vpop.f32.mrb[0].mxu0
  %v445 = vadd.f32 %v103, %v444
  %v446 = vpop.f32.mrb[0].mxu0
  %v447 = vadd.f32 %v107, %v446
  %448 = vmatprep.mubr.bf16.mxu0 0
  %449 = vmatmul.mubr.bf16.gmra.mrb[0].mxu0 %v187
  %v450 = vpop.f32.mrb[0].mxu0
  %v451 = vadd.f32 %v103, %v450
  %v452 = vpop.f32.mrb[0].mxu0
  %v453 = vadd.f32 %v107, %v452
  %v454 = vpop.f32.mrb[0].mxu0
  %v455 = vadd.f32 %v103, %v454
  %v456 = vpop.f32.mrb[0].mxu0
  %v457 = vadd.f32 %v107, %v456
  %458 = vmatprep.mubr.bf16.mxu0 0
  %459 = vmatmul.mubr.bf16.gmra.mrb[0].mxu0 %v188
  %v460 = vpop.f32.mrb[0].mxu0
  %v461 = vadd.f32 %v103, %v460
  %v462 = vpop.f32.mrb[0].mxu0
  %v463 = vadd.f32 %v107, %v462
  %v464 = vpop.f32.mrb[0].mxu0
  %v465 = vadd.f32 %v103, %v464
  %v466 = vpop.f32.mrb[0].mxu0
  %v467 = vadd.f32 %v107, %v466
  %468 = vmatprep.mubr.bf16.mxu0 0
  %469 = vmatmul.mubr.bf16.gmra.mrb[0].mxu0 %v189
  %v470 = vpop.f32.mrb[0].mxu0
  %v471 = vadd.f32 %v103, %v470
  %v472 = vpop.f32.mrb[0].mxu0
  %v473 = vadd.f32 %v107, %v472
  %v474 = vpop.f32.mrb[0].mxu0
  %v475 = vadd.f32 %v103, %v474
  %v476 = vpop.f32.mrb[0].mxu0
  %v477 = vadd.f32 %v107, %v476
  %478 = vdwg.mxu0
  %v479 = vmax.f32 %v321, 0.0
  %v480 = vmax.f32 %v323, 0.0
  %v481 = vmax.f32 %v325, 0.0
  %v482 = vmax.f32 %v327, 0.0
  %v483 = vmax.f32 %v331, 0.0
  %v484 = vmax.f32 %v333, 0.0
  %v485 = vmax.f32 %v335, 0.0
  %v486 = vmax.f32 %v337, 0.0
  %v487 = vmax.f32 %v341, 0.0
  %v488 = vmax.f32 %v343, 0.0
  %v489 = vmax.f32 %v345, 0.0
  %v490 = vmax.f32 %v347, 0.0
  %v491 = vmax.f32 %v351, 0.0
  %v492 = vmax.f32 %v353, 0.0
  %v493 = vmax.f32 %v355, 0.0
  %v494 = vmax.f32 %v357, 0.0
  %v495 = vmax.f32 %v361, 0.0
  %v496 = vmax.f32 %v363, 0.0
  %v497 = vmax.f32 %v365, 0.0
  %v498 = vmax.f32 %v367, 0.0
  %v499 = vmax.f32 %v371, 0.0
  %v500 = vmax.f32 %v373, 0.0
  %v501 = vmax.f32 %v375, 0.0
  %v502 = vmax.f32 %v377, 0.0
  %v503 = vmax.f32 %v381, 0.0
  %v504 = vmax.f32 %v383, 0.0
  %v505 = vmax.f32 %v385, 0.0
  %v506 = vmax.f32 %v387, 0.0
  %v507 = vmax.f32 %v391, 0.0
  %v508 = vmax.f32 %v393, 0.0
  %v509 = vmax.f32 %v395, 0.0
  %v510 = vmax.f32 %v397, 0.0
  %v511 = vmax.f32 %v401, 0.0
  %v512 = vmax.f32 %v403, 0.0
  %v513 = vmax.f32 %v405, 0.0
  %v514 = vmax.f32 %v407, 0.0
  %v515 = vmax.f32 %v411, 0.0
  %v516 = vmax.f32 %v413, 0.0
  %v517 = vmax.f32 %v415, 0.0
  %v518 = vmax.f32 %v417, 0.0
  %v519 = vmax.f32 %v421, 0.0
  %v520 = vmax.f32 %v423, 0.0
  %v521 = vmax.f32 %v425, 0.0
  %v522 = vmax.f32 %v427, 0.0
  %v523 = vmax.f32 %v431, 0.0
  %v524 = vmax.f32 %v433, 0.0
  %v525 = vmax.f32 %v435, 0.0
  %v526 = vmax.f32 %v437, 0.0
  %v527 = vmax.f32 %v441, 0.0
  %v528 = vmax.f32 %v443, 0.0
  %v529 = vmax.f32 %v445, 0.0
  %v530 = vmax.f32 %v447, 0.0
  %v531 = vmax.f32 %v451, 0.0
  %v532 = vmax.f32 %v453, 0.0
  %v533 = vmax.f32 %v455, 0.0
  %v534 = vmax.f32 %v457, 0.0
  %v535 = vmax.f32 %v461, 0.0
  %v536 = vmax.f32 %v463, 0.0
  %v537 = vmax.f32 %v465, 0.0
  %v538 = vmax.f32 %v467, 0.0
  %v539 = vmax.f32 %v471, 0.0
  %v540 = vmax.f32 %v473, 0.0
  %v541 = vmax.f32 %v475, 0.0
  %v542 = vmax.f32 %v477, 0.0
  %v543 = vpack.c.bf16 %v481, %v479
  %v544 = vpack.c.bf16 %v482, %v480
  %v545 = vpack.c.bf16 %v485, %v483
  %v546 = vpack.c.bf16 %v486, %v484
  %v547 = vpack.c.bf16 %v489, %v487
  %v548 = vpack.c.bf16 %v490, %v488
  %v549 = vpack.c.bf16 %v493, %v491
  %v550 = vpack.c.bf16 %v494, %v492
  %v551 = vpack.c.bf16 %v497, %v495
  %v552 = vpack.c.bf16 %v498, %v496
  %v553 = vpack.c.bf16 %v501, %v499
  %v554 = vpack.c.bf16 %v502, %v500
  %v555 = vpack.c.bf16 %v505, %v503
  %v556 = vpack.c.bf16 %v506, %v504
  %v557 = vpack.c.bf16 %v509, %v507
  %v558 = vpack.c.bf16 %v510, %v508
  %v559 = vpack.c.bf16 %v513, %v511
  %v560 = vpack.c.bf16 %v514, %v512
  %v561 = vpack.c.bf16 %v517, %v515
  %v562 = vpack.c.bf16 %v518, %v516
  %v563 = vpack.c.bf16 %v521, %v519
  %v564 = vpack.c.bf16 %v522, %v520
  %v565 = vpack.c.bf16 %v525, %v523
  %v566 = vpack.c.bf16 %v526, %v524
  %v567 = vpack.c.bf16 %v529, %v527
  %v568 = vpack.c.bf16 %v530, %v528
  %v569 = vpack.c.bf16 %v533, %v531
  %v570 = vpack.c.bf16 %v534, %v532
  %v571 = vpack.c.bf16 %v537, %v535
  %v572 = vpack.c.bf16 %v538, %v536
  %v573 = vpack.c.bf16 %v541, %v539
  %v574 = vpack.c.bf16 %v542, %v540
  %v575 = vld [vmem:[%s3] sm:$0xff]
  %v576 = vld [vmem:[%s3 + $0x8] sm:$0xff]
  %v577 = vld [vmem:[%s3 + $0x10] sm:$0xff]
  %v578 = vld [vmem:[%s3 + $0x18] sm:$0xff]
  %v579 = vld [vmem:[%s3 + $0x20] sm:$0xff]
  %v580 = vld [vmem:[%s3 + $0x28] sm:$0xff]
  %v581 = vld [vmem:[%s3 + $0x30] sm:$0xff]
  %v582 = vld [vmem:[%s3 + $0x38] sm:$0xff]
  %v583 = vld [vmem:[%s3 + $0x40] sm:$0xff]
  %v584 = vld [vmem:[%s3 + $0x48] sm:$0xff]
  %v585 = vld [vmem:[%s3 + $0x50] sm:$0xff]
  %v586 = vld [vmem:[%s3 + $0x58] sm:$0xff]
  %v587 = vld [vmem:[%s3 + $0x60] sm:$0xff]
  %v588 = vld [vmem:[%s3 + $0x68] sm:$0xff]
  %v589 = vld [vmem:[%s3 + $0x70] sm:$0xff]
  %v590 = vld [vmem:[%s3 + $0x78] sm:$0xff]
  %v591 = vld [vmem:[%s3 + $0x80] sm:$0xff]
  %v592 = vld [vmem:[%s3 + $0x88] sm:$0xff]
  %v593 = vld [vmem:[%s3 + $0x90] sm:$0xff]
  %v594 = vld [vmem:[%s3 + $0x98] sm:$0xff]
  %v595 = vld [vmem:[%s3 + $0xa0] sm:$0xff]
  %v596 = vld [vmem:[%s3 + $0xa8] sm:$0xff]
  %v597 = vld [vmem:[%s3 + $0xb0] sm:$0xff]
  %v598 = vld [vmem:[%s3 + $0xb8] sm:$0xff]
  %v599 = vld [vmem:[%s3 + $0xc0] sm:$0xff]
  %v600 = vld [vmem:[%s3 + $0xc8] sm:$0xff]
  %v601 = vld [vmem:[%s3 + $0xd0] sm:$0xff]
  %v602 = vld [vmem:[%s3 + $0xd8] sm:$0xff]
  %v603 = vld [vmem:[%s3 + $0xe0] sm:$0xff]
  %v604 = vld [vmem:[%s3 + $0xe8] sm:$0xff]
  %v605 = vld [vmem:[%s3 + $0xf0] sm:$0xff]
  %v606 = vld [vmem:[%s3 + $0xf8] sm:$0xff]
  %v607 = vld [vmem:[%s4] sm:$0x3]
  %v609 = vlaneseq
  %v610 = vshrl.u32 %v609, 7
  %v611 = vsub.s32 0, %v610
  %v612 = vrot.slane %v607, %v611
  %v613 = vlaneseq
  %v614 = vshrl.u32 %v613, 7
  %v615 = vsub.s32 1, %v614
  %v616 = vrot.slane %v607, %v615
  %v651 = vunpack.c.l.b16 %v575
  %v652 = vunpack.c.h.b16 %v575
  %v653 = vunpack.c.l.b16 %v576
  %v654 = vunpack.c.h.b16 %v576
  %v655 = vunpack.c.l.b16 %v577
  %v656 = vunpack.c.h.b16 %v577
  %v657 = vunpack.c.l.b16 %v578
  %v658 = vunpack.c.h.b16 %v578
  %v659 = vunpack.c.l.b16 %v579
  %v660 = vunpack.c.h.b16 %v579
  %v661 = vunpack.c.l.b16 %v580
  %v662 = vunpack.c.h.b16 %v580
  %v663 = vunpack.c.l.b16 %v581
  %v664 = vunpack.c.h.b16 %v581
  %v665 = vunpack.c.l.b16 %v582
  %v666 = vunpack.c.h.b16 %v582
  %v667 = vunpack.c.l.b16 %v583
  %v668 = vunpack.c.h.b16 %v583
  %v669 = vunpack.c.l.b16 %v584
  %v670 = vunpack.c.h.b16 %v584
  %v671 = vunpack.c.l.b16 %v585
  %v672 = vunpack.c.h.b16 %v585
  %v673 = vunpack.c.l.b16 %v586
  %v674 = vunpack.c.h.b16 %v586
  %v675 = vunpack.c.l.b16 %v587
  %v676 = vunpack.c.h.b16 %v587
  %v677 = vunpack.c.l.b16 %v588
  %v678 = vunpack.c.h.b16 %v588
  %v679 = vunpack.c.l.b16 %v589
  %v680 = vunpack.c.h.b16 %v589
  %v681 = vunpack.c.l.b16 %v590
  %v682 = vunpack.c.h.b16 %v590
  %v683 = vunpack.c.l.b16 %v591
  %v684 = vunpack.c.h.b16 %v591
  %v685 = vunpack.c.l.b16 %v592
  %v686 = vunpack.c.h.b16 %v592
  %v687 = vunpack.c.l.b16 %v593
  %v688 = vunpack.c.h.b16 %v593
  %v689 = vunpack.c.l.b16 %v594
  %v690 = vunpack.c.h.b16 %v594
  %v691 = vunpack.c.l.b16 %v595
  %v692 = vunpack.c.h.b16 %v595
  %v693 = vunpack.c.l.b16 %v596
  %v694 = vunpack.c.h.b16 %v596
  %v695 = vunpack.c.l.b16 %v597
  %v696 = vunpack.c.h.b16 %v597
  %v697 = vunpack.c.l.b16 %v598
  %v698 = vunpack.c.h.b16 %v598
  %v699 = vunpack.c.l.b16 %v599
  %v700 = vunpack.c.h.b16 %v599
  %v701 = vunpack.c.l.b16 %v600
  %v702 = vunpack.c.h.b16 %v600
  %v703 = vunpack.c.l.b16 %v601
  %v704 = vunpack.c.h.b16 %v601
  %v705 = vunpack.c.l.b16 %v602
  %v706 = vunpack.c.h.b16 %v602
  %v707 = vunpack.c.l.b16 %v603
  %v708 = vunpack.c.h.b16 %v603
  %v709 = vunpack.c.l.b16 %v604
  %v710 = vunpack.c.h.b16 %v604
  %v711 = vunpack.c.l.b16 %v605
  %v712 = vunpack.c.h.b16 %v605
  %v713 = vunpack.c.l.b16 %v606
  %v714 = vunpack.c.h.b16 %v606
  %v715 = vpack.c.b16 %v653, %v651
  %v716 = vpack.c.b16 %v654, %v652
  %v717 = vpack.c.b16 %v657, %v655
  %v718 = vpack.c.b16 %v658, %v656
  %v719 = vpack.c.b16 %v661, %v659
  %v720 = vpack.c.b16 %v662, %v660
  %v721 = vpack.c.b16 %v665, %v663
  %v722 = vpack.c.b16 %v666, %v664
  %v723 = vpack.c.b16 %v669, %v667
  %v724 = vpack.c.b16 %v670, %v668
  %v725 = vpack.c.b16 %v673, %v671
  %v726 = vpack.c.b16 %v674, %v672
  %v727 = vpack.c.b16 %v677, %v675
  %v728 = vpack.c.b16 %v678, %v676
  %v729 = vpack.c.b16 %v681, %v679
  %v730 = vpack.c.b16 %v682, %v680
  %v731 = vpack.c.b16 %v685, %v683
  %v732 = vpack.c.b16 %v686, %v684
  %v733 = vpack.c.b16 %v689, %v687
  %v734 = vpack.c.b16 %v690, %v688
  %v735 = vpack.c.b16 %v693, %v691
  %v736 = vpack.c.b16 %v694, %v692
  %v737 = vpack.c.b16 %v697, %v695
  %v738 = vpack.c.b16 %v698, %v696
  %v739 = vpack.c.b16 %v701, %v699
  %v740 = vpack.c.b16 %v702, %v700
  %v741 = vpack.c.b16 %v705, %v703
  %v742 = vpack.c.b16 %v706, %v704
  %v743 = vpack.c.b16 %v709, %v707
  %v744 = vpack.c.b16 %v710, %v708
  %v745 = vpack.c.b16 %v713, %v711
  %v746 = vpack.c.b16 %v714, %v712
  %779 = vmatprep.subr.bf16.mxu0 %v716
  %780 = vmatpush1.bf16.msra.mxu0 %v715
  %781 = vmatprep.subr.bf16.mxu0 %v718
  %782 = vmatpush1.bf16.msra.mxu0 %v717
  %783 = vmatprep.subr.bf16.mxu0 %v720
  %784 = vmatpush1.bf16.msra.mxu0 %v719
  %785 = vmatprep.subr.bf16.mxu0 %v722
  %786 = vmatpush1.bf16.msra.mxu0 %v721
  %787 = vmatprep.subr.bf16.mxu0 %v724
  %788 = vmatpush1.bf16.msra.mxu0 %v723
  %789 = vmatprep.subr.bf16.mxu0 %v726
  %790 = vmatpush1.bf16.msra.mxu0 %v725
  %791 = vmatprep.subr.bf16.mxu0 %v728
  %792 = vmatpush1.bf16.msra.mxu0 %v727
  %793 = vmatprep.subr.bf16.mxu0 %v730
  %794 = vmatpush1.bf16.msra.mxu0 %v729
  %795 = vmatprep.subr.bf16.mxu0 %v732
  %796 = vmatpush1.bf16.msra.mxu0 %v731
  %797 = vmatprep.subr.bf16.mxu0 %v734
  %798 = vmatpush1.bf16.msra.mxu0 %v733
  %799 = vmatprep.subr.bf16.mxu0 %v736
  %800 = vmatpush1.bf16.msra.mxu0 %v735
  %801 = vmatprep.subr.bf16.mxu0 %v738
  %802 = vmatpush1.bf16.msra.mxu0 %v737
  %803 = vmatprep.subr.bf16.mxu0 %v740
  %804 = vmatpush1.bf16.msra.mxu0 %v739
  %805 = vmatprep.subr.bf16.mxu0 %v742
  %806 = vmatpush1.bf16.msra.mxu0 %v741
  %807 = vmatprep.subr.bf16.mxu0 %v744
  %808 = vmatpush1.bf16.msra.mxu0 %v743
  %809 = vmatprep.subr.bf16.mxu0 %v746
  %810 = vmatpush1.bf16.msra.mxu0 %v745
  %811 = vmatprep.mubr.bf16.mxu0 %v544
  %812 = vmatmul.mubr.bf16.gmra.mrb[0].mxu0 %v543
  %v813 = vpop.f32.mrb[0].mxu0
  %v814 = vadd.f32 %v612, %v813
  %v815 = vpop.f32.mrb[0].mxu0
  %v816 = vadd.f32 %v616, %v815
  %v817 = vpop.f32.mrb[0].mxu0
  %v818 = vadd.f32 %v612, %v817
  %v819 = vpop.f32.mrb[0].mxu0
  %v820 = vadd.f32 %v616, %v819
  %821 = vmatprep.mubr.bf16.mxu0 %v546
  %822 = vmatmul.mubr.bf16.gmra.mrb[0].mxu0 %v545
  %v823 = vpop.f32.mrb[0].mxu0
  %v824 = vadd.f32 %v612, %v823
  %v825 = vpop.f32.mrb[0].mxu0
  %v826 = vadd.f32 %v616, %v825
  %v827 = vpop.f32.mrb[0].mxu0
  %v828 = vadd.f32 %v612, %v827
  %v829 = vpop.f32.mrb[0].mxu0
  %v830 = vadd.f32 %v616, %v829
  %831 = vmatprep.mubr.bf16.mxu0 %v548
  %832 = vmatmul.mubr.bf16.gmra.mrb[0].mxu0 %v547
  %v833 = vpop.f32.mrb[0].mxu0
  %v834 = vadd.f32 %v612, %v833
  %v835 = vpop.f32.mrb[0].mxu0
  %v836 = vadd.f32 %v616, %v835
  %v837 = vpop.f32.mrb[0].mxu0
  %v838 = vadd.f32 %v612, %v837
  %v839 = vpop.f32.mrb[0].mxu0
  %v840 = vadd.f32 %v616, %v839
  %841 = vmatprep.mubr.bf16.mxu0 %v550
  %842 = vmatmul.mubr.bf16.gmra.mrb[0].mxu0 %v549
  %v843 = vpop.f32.mrb[0].mxu0
  %v844 = vadd.f32 %v612, %v843
  %v845 = vpop.f32.mrb[0].mxu0
  %v846 = vadd.f32 %v616, %v845
  %v847 = vpop.f32.mrb[0].mxu0
  %v848 = vadd.f32 %v612, %v847
  %v849 = vpop.f32.mrb[0].mxu0
  %v850 = vadd.f32 %v616, %v849
  %851 = vmatprep.mubr.bf16.mxu0 %v552
  %852 = vmatmul.mubr.bf16.gmra.mrb[0].mxu0 %v551
  %v853 = vpop.f32.mrb[0].mxu0
  %v854 = vadd.f32 %v612, %v853
  %v855 = vpop.f32.mrb[0].mxu0
  %v856 = vadd.f32 %v616, %v855
  %v857 = vpop.f32.mrb[0].mxu0
  %v858 = vadd.f32 %v612, %v857
  %v859 = vpop.f32.mrb[0].mxu0
  %v860 = vadd.f32 %v616, %v859
  %861 = vmatprep.mubr.bf16.mxu0 %v554
  %862 = vmatmul.mubr.bf16.gmra.mrb[0].mxu0 %v553
  %v863 = vpop.f32.mrb[0].mxu0
  %v864 = vadd.f32 %v612, %v863
  %v865 = vpop.f32.mrb[0].mxu0
  %v866 = vadd.f32 %v616, %v865
  %v867 = vpop.f32.mrb[0].mxu0
  %v868 = vadd.f32 %v612, %v867
  %v869 = vpop.f32.mrb[0].mxu0
  %v870 = vadd.f32 %v616, %v869
  %871 = vmatprep.mubr.bf16.mxu0 %v556
  %872 = vmatmul.mubr.bf16.gmra.mrb[0].mxu0 %v555
  %v873 = vpop.f32.mrb[0].mxu0
  %v874 = vadd.f32 %v612, %v873
  %v875 = vpop.f32.mrb[0].mxu0
  %v876 = vadd.f32 %v616, %v875
  %v877 = vpop.f32.mrb[0].mxu0
  %v878 = vadd.f32 %v612, %v877
  %v879 = vpop.f32.mrb[0].mxu0
  %v880 = vadd.f32 %v616, %v879
  %881 = vmatprep.mubr.bf16.mxu0 %v558
  %882 = vmatmul.mubr.bf16.gmra.mrb[0].mxu0 %v557
  %v883 = vpop.f32.mrb[0].mxu0
  %v884 = vadd.f32 %v612, %v883
  %v885 = vpop.f32.mrb[0].mxu0
  %v886 = vadd.f32 %v616, %v885
  %v887 = vpop.f32.mrb[0].mxu0
  %v888 = vadd.f32 %v612, %v887
  %v889 = vpop.f32.mrb[0].mxu0
  %v890 = vadd.f32 %v616, %v889
  %891 = vmatprep.mubr.bf16.mxu0 %v560
  %892 = vmatmul.mubr.bf16.gmra.mrb[0].mxu0 %v559
  %v893 = vpop.f32.mrb[0].mxu0
  %v894 = vadd.f32 %v612, %v893
  %v895 = vpop.f32.mrb[0].mxu0
  %v896 = vadd.f32 %v616, %v895
  %v897 = vpop.f32.mrb[0].mxu0
  %v898 = vadd.f32 %v612, %v897
  %v899 = vpop.f32.mrb[0].mxu0
  %v900 = vadd.f32 %v616, %v899
  %901 = vmatprep.mubr.bf16.mxu0 %v562
  %902 = vmatmul.mubr.bf16.gmra.mrb[0].mxu0 %v561
  %v903 = vpop.f32.mrb[0].mxu0
  %v904 = vadd.f32 %v612, %v903
  %v905 = vpop.f32.mrb[0].mxu0
  %v906 = vadd.f32 %v616, %v905
  %v907 = vpop.f32.mrb[0].mxu0
  %v908 = vadd.f32 %v612, %v907
  %v909 = vpop.f32.mrb[0].mxu0
  %v910 = vadd.f32 %v616, %v909
  %911 = vmatprep.mubr.bf16.mxu0 %v564
  %912 = vmatmul.mubr.bf16.gmra.mrb[0].mxu0 %v563
  %v913 = vpop.f32.mrb[0].mxu0
  %v914 = vadd.f32 %v612, %v913
  %v915 = vpop.f32.mrb[0].mxu0
  %v916 = vadd.f32 %v616, %v915
  %v917 = vpop.f32.mrb[0].mxu0
  %v918 = vadd.f32 %v612, %v917
  %v919 = vpop.f32.mrb[0].mxu0
  %v920 = vadd.f32 %v616, %v919
  %921 = vmatprep.mubr.bf16.mxu0 %v566
  %922 = vmatmul.mubr.bf16.gmra.mrb[0].mxu0 %v565
  %v923 = vpop.f32.mrb[0].mxu0
  %v924 = vadd.f32 %v612, %v923
  %v925 = vpop.f32.mrb[0].mxu0
  %v926 = vadd.f32 %v616, %v925
  %v927 = vpop.f32.mrb[0].mxu0
  %v928 = vadd.f32 %v612, %v927
  %v929 = vpop.f32.mrb[0].mxu0
  %v930 = vadd.f32 %v616, %v929
  %931 = vmatprep.mubr.bf16.mxu0 %v568
  %932 = vmatmul.mubr.bf16.gmra.mrb[0].mxu0 %v567
  %v933 = vpop.f32.mrb[0].mxu0
  %v934 = vadd.f32 %v612, %v933
  %v935 = vpop.f32.mrb[0].mxu0
  %v936 = vadd.f32 %v616, %v935
  %v937 = vpop.f32.mrb[0].mxu0
  %v938 = vadd.f32 %v612, %v937
  %v939 = vpop.f32.mrb[0].mxu0
  %v940 = vadd.f32 %v616, %v939
  %941 = vmatprep.mubr.bf16.mxu0 %v570
  %942 = vmatmul.mubr.bf16.gmra.mrb[0].mxu0 %v569
  %v943 = vpop.f32.mrb[0].mxu0
  %v944 = vadd.f32 %v612, %v943
  %v945 = vpop.f32.mrb[0].mxu0
  %v946 = vadd.f32 %v616, %v945
  %v947 = vpop.f32.mrb[0].mxu0
  %v948 = vadd.f32 %v612, %v947
  %v949 = vpop.f32.mrb[0].mxu0
  %v950 = vadd.f32 %v616, %v949
  %951 = vmatprep.mubr.bf16.mxu0 %v572
  %952 = vmatmul.mubr.bf16.gmra.mrb[0].mxu0 %v571
  %v953 = vpop.f32.mrb[0].mxu0
  %v954 = vadd.f32 %v612, %v953
  %v955 = vpop.f32.mrb[0].mxu0
  %v956 = vadd.f32 %v616, %v955
  %v957 = vpop.f32.mrb[0].mxu0
  %v958 = vadd.f32 %v612, %v957
  %v959 = vpop.f32.mrb[0].mxu0
  %v960 = vadd.f32 %v616, %v959
  %961 = vmatprep.mubr.bf16.mxu0 %v574
  %962 = vmatmul.mubr.bf16.gmra.mrb[0].mxu0 %v573
  %v963 = vpop.f32.mrb[0].mxu0
  %v964 = vadd.f32 %v612, %v963
  %v965 = vpop.f32.mrb[0].mxu0
  %v966 = vadd.f32 %v616, %v965
  %v967 = vpop.f32.mrb[0].mxu0
  %v968 = vadd.f32 %v612, %v967
  %v969 = vpop.f32.mrb[0].mxu0
  %v970 = vadd.f32 %v616, %v969
  %971 = vdwg.mxu0
  %v972 = vmax.f32 %v814, 0.0
  %v973 = vmax.f32 %v816, 0.0
  %v974 = vmax.f32 %v818, 0.0
  %v975 = vmax.f32 %v820, 0.0
  %v976 = vmax.f32 %v824, 0.0
  %v977 = vmax.f32 %v826, 0.0
  %v978 = vmax.f32 %v828, 0.0
  %v979 = vmax.f32 %v830, 0.0
  %v980 = vmax.f32 %v834, 0.0
  %v981 = vmax.f32 %v836, 0.0
  %v982 = vmax.f32 %v838, 0.0
  %v983 = vmax.f32 %v840, 0.0
  %v984 = vmax.f32 %v844, 0.0
  %v985 = vmax.f32 %v846, 0.0
  %v986 = vmax.f32 %v848, 0.0
  %v987 = vmax.f32 %v850, 0.0
  %v988 = vmax.f32 %v854, 0.0
  %v989 = vmax.f32 %v856, 0.0
  %v990 = vmax.f32 %v858, 0.0
  %v991 = vmax.f32 %v860, 0.0
  %v992 = vmax.f32 %v864, 0.0
  %v993 = vmax.f32 %v866, 0.0
  %v994 = vmax.f32 %v868, 0.0
  %v995 = vmax.f32 %v870, 0.0
  %v996 = vmax.f32 %v874, 0.0
  %v997 = vmax.f32 %v876, 0.0
  %v998 = vmax.f32 %v878, 0.0
  %v999 = vmax.f32 %v880, 0.0
  %v1000 = vmax.f32 %v884, 0.0
  %v1001 = vmax.f32 %v886, 0.0
  %v1002 = vmax.f32 %v888, 0.0
  %v1003 = vmax.f32 %v890, 0.0
  %v1004 = vmax.f32 %v894, 0.0
  %v1005 = vmax.f32 %v896, 0.0
  %v1006 = vmax.f32 %v898, 0.0
  %v1007 = vmax.f32 %v900, 0.0
  %v1008 = vmax.f32 %v904, 0.0
  %v1009 = vmax.f32 %v906, 0.0
  %v1010 = vmax.f32 %v908, 0.0
  %v1011 = vmax.f32 %v910, 0.0
  %v1012 = vmax.f32 %v914, 0.0
  %v1013 = vmax.f32 %v916, 0.0
  %v1014 = vmax.f32 %v918, 0.0
  %v1015 = vmax.f32 %v920, 0.0
  %v1016 = vmax.f32 %v924, 0.0
  %v1017 = vmax.f32 %v926, 0.0
  %v1018 = vmax.f32 %v928, 0.0
  %v1019 = vmax.f32 %v930, 0.0
  %v1020 = vmax.f32 %v934, 0.0
  %v1021 = vmax.f32 %v936, 0.0
  %v1022 = vmax.f32 %v938, 0.0
  %v1023 = vmax.f32 %v940, 0.0
  %v1024 = vmax.f32 %v944, 0.0
  %v1025 = vmax.f32 %v946, 0.0
  %v1026 = vmax.f32 %v948, 0.0
  %v1027 = vmax.f32 %v950, 0.0
  %v1028 = vmax.f32 %v954, 0.0
  %v1029 = vmax.f32 %v956, 0.0
  %v1030 = vmax.f32 %v958, 0.0
  %v1031 = vmax.f32 %v960, 0.0
  %v1032 = vmax.f32 %v964, 0.0
  %v1033 = vmax.f32 %v966, 0.0
  %v1034 = vmax.f32 %v968, 0.0
  %v1035 = vmax.f32 %v970, 0.0
  %v1036 = vpack.c.bf16 %v974, %v972
  %v1037 = vpack.c.bf16 %v975, %v973
  %v1038 = vpack.c.bf16 %v978, %v976
  %v1039 = vpack.c.bf16 %v979, %v977
  %v1040 = vpack.c.bf16 %v982, %v980
  %v1041 = vpack.c.bf16 %v983, %v981
  %v1042 = vpack.c.bf16 %v986, %v984
  %v1043 = vpack.c.bf16 %v987, %v985
  %v1044 = vpack.c.bf16 %v990, %v988
  %v1045 = vpack.c.bf16 %v991, %v989
  %v1046 = vpack.c.bf16 %v994, %v992
  %v1047 = vpack.c.bf16 %v995, %v993
  %v1048 = vpack.c.bf16 %v998, %v996
  %v1049 = vpack.c.bf16 %v999, %v997
  %v1050 = vpack.c.bf16 %v1002, %v1000
  %v1051 = vpack.c.bf16 %v1003, %v1001
  %v1052 = vpack.c.bf16 %v1006, %v1004
  %v1053 = vpack.c.bf16 %v1007, %v1005
  %v1054 = vpack.c.bf16 %v1010, %v1008
  %v1055 = vpack.c.bf16 %v1011, %v1009
  %v1056 = vpack.c.bf16 %v1014, %v1012
  %v1057 = vpack.c.bf16 %v1015, %v1013
  %v1058 = vpack.c.bf16 %v1018, %v1016
  %v1059 = vpack.c.bf16 %v1019, %v1017
  %v1060 = vpack.c.bf16 %v1022, %v1020
  %v1061 = vpack.c.bf16 %v1023, %v1021
  %v1062 = vpack.c.bf16 %v1026, %v1024
  %v1063 = vpack.c.bf16 %v1027, %v1025
  %v1064 = vpack.c.bf16 %v1030, %v1028
  %v1065 = vpack.c.bf16 %v1031, %v1029
  %v1066 = vpack.c.bf16 %v1034, %v1032
  %v1067 = vpack.c.bf16 %v1035, %v1033
  %v1068 = vld [vmem:[%s5] sm:$0xff]
  %v1069 = vld [vmem:[%s5 + $0x8] sm:$0xff]
  %v1070 = vld [vmem:[%s5 + $0x10] sm:$0xff]
  %v1071 = vld [vmem:[%s5 + $0x18] sm:$0xff]
  %v1072 = vld [vmem:[%s5 + $0x20] sm:$0xff]
  %v1073 = vld [vmem:[%s5 + $0x28] sm:$0xff]
  %v1074 = vld [vmem:[%s5 + $0x30] sm:$0xff]
  %v1075 = vld [vmem:[%s5 + $0x38] sm:$0xff]
  %v1076 = vld [vmem:[%s5 + $0x40] sm:$0xff]
  %v1077 = vld [vmem:[%s5 + $0x48] sm:$0xff]
  %v1078 = vld [vmem:[%s5 + $0x50] sm:$0xff]
  %v1079 = vld [vmem:[%s5 + $0x58] sm:$0xff]
  %v1080 = vld [vmem:[%s5 + $0x60] sm:$0xff]
  %v1081 = vld [vmem:[%s5 + $0x68] sm:$0xff]
  %v1082 = vld [vmem:[%s5 + $0x70] sm:$0xff]
  %v1083 = vld [vmem:[%s5 + $0x78] sm:$0xff]
  %v1084 = vld [vmem:[%s5 + $0x80] sm:$0xff]
  %v1085 = vld [vmem:[%s5 + $0x88] sm:$0xff]
  %v1086 = vld [vmem:[%s5 + $0x90] sm:$0xff]
  %v1087 = vld [vmem:[%s5 + $0x98] sm:$0xff]
  %v1088 = vld [vmem:[%s5 + $0xa0] sm:$0xff]
  %v1089 = vld [vmem:[%s5 + $0xa8] sm:$0xff]
  %v1090 = vld [vmem:[%s5 + $0xb0] sm:$0xff]
  %v1091 = vld [vmem:[%s5 + $0xb8] sm:$0xff]
  %v1092 = vld [vmem:[%s5 + $0xc0] sm:$0xff]
  %v1093 = vld [vmem:[%s5 + $0xc8] sm:$0xff]
  %v1094 = vld [vmem:[%s5 + $0xd0] sm:$0xff]
  %v1095 = vld [vmem:[%s5 + $0xd8] sm:$0xff]
  %v1096 = vld [vmem:[%s5 + $0xe0] sm:$0xff]
  %v1097 = vld [vmem:[%s5 + $0xe8] sm:$0xff]
  %v1098 = vld [vmem:[%s5 + $0xf0] sm:$0xff]
  %v1099 = vld [vmem:[%s5 + $0xf8] sm:$0xff]
  %v1100 = vld [vmem:[%s6] sm:$0x3]
  %v1102 = vlaneseq
  %v1103 = vshrl.u32 %v1102, 7
  %v1104 = vsub.s32 0, %v1103
  %v1105 = vrot.slane %v1100, %v1104
  %v1106 = vlaneseq
  %v1107 = vshrl.u32 %v1106, 7
  %v1108 = vsub.s32 1, %v1107
  %v1109 = vrot.slane %v1100, %v1108
  %v1144 = vunpack.c.l.b16 %v1068
  %v1145 = vunpack.c.h.b16 %v1068
  %v1146 = vunpack.c.l.b16 %v1069
  %v1147 = vunpack.c.h.b16 %v1069
  %v1148 = vunpack.c.l.b16 %v1070
  %v1149 = vunpack.c.h.b16 %v1070
  %v1150 = vunpack.c.l.b16 %v1071
  %v1151 = vunpack.c.h.b16 %v1071
  %v1152 = vunpack.c.l.b16 %v1072
  %v1153 = vunpack.c.h.b16 %v1072
  %v1154 = vunpack.c.l.b16 %v1073
  %v1155 = vunpack.c.h.b16 %v1073
  %v1156 = vunpack.c.l.b16 %v1074
  %v1157 = vunpack.c.h.b16 %v1074
  %v1158 = vunpack.c.l.b16 %v1075
  %v1159 = vunpack.c.h.b16 %v1075
  %v1160 = vunpack.c.l.b16 %v1076
  %v1161 = vunpack.c.h.b16 %v1076
  %v1162 = vunpack.c.l.b16 %v1077
  %v1163 = vunpack.c.h.b16 %v1077
  %v1164 = vunpack.c.l.b16 %v1078
  %v1165 = vunpack.c.h.b16 %v1078
  %v1166 = vunpack.c.l.b16 %v1079
  %v1167 = vunpack.c.h.b16 %v1079
  %v1168 = vunpack.c.l.b16 %v1080
  %v1169 = vunpack.c.h.b16 %v1080
  %v1170 = vunpack.c.l.b16 %v1081
  %v1171 = vunpack.c.h.b16 %v1081
  %v1172 = vunpack.c.l.b16 %v1082
  %v1173 = vunpack.c.h.b16 %v1082
  %v1174 = vunpack.c.l.b16 %v1083
  %v1175 = vunpack.c.h.b16 %v1083
  %v1176 = vunpack.c.l.b16 %v1084
  %v1177 = vunpack.c.h.b16 %v1084
  %v1178 = vunpack.c.l.b16 %v1085
  %v1179 = vunpack.c.h.b16 %v1085
  %v1180 = vunpack.c.l.b16 %v1086
  %v1181 = vunpack.c.h.b16 %v1086
  %v1182 = vunpack.c.l.b16 %v1087
  %v1183 = vunpack.c.h.b16 %v1087
  %v1184 = vunpack.c.l.b16 %v1088
  %v1185 = vunpack.c.h.b16 %v1088
  %v1186 = vunpack.c.l.b16 %v1089
  %v1187 = vunpack.c.h.b16 %v1089
  %v1188 = vunpack.c.l.b16 %v1090
  %v1189 = vunpack.c.h.b16 %v1090
  %v1190 = vunpack.c.l.b16 %v1091
  %v1191 = vunpack.c.h.b16 %v1091
  %v1192 = vunpack.c.l.b16 %v1092
  %v1193 = vunpack.c.h.b16 %v1092
  %v1194 = vunpack.c.l.b16 %v1093
  %v1195 = vunpack.c.h.b16 %v1093
  %v1196 = vunpack.c.l.b16 %v1094
  %v1197 = vunpack.c.h.b16 %v1094
  %v1198 = vunpack.c.l.b16 %v1095
  %v1199 = vunpack.c.h.b16 %v1095
  %v1200 = vunpack.c.l.b16 %v1096
  %v1201 = vunpack.c.h.b16 %v1096
  %v1202 = vunpack.c.l.b16 %v1097
  %v1203 = vunpack.c.h.b16 %v1097
  %v1204 = vunpack.c.l.b16 %v1098
  %v1205 = vunpack.c.h.b16 %v1098
  %v1206 = vunpack.c.l.b16 %v1099
  %v1207 = vunpack.c.h.b16 %v1099
  %v1208 = vpack.c.b16 %v1146, %v1144
  %v1209 = vpack.c.b16 %v1147, %v1145
  %v1210 = vpack.c.b16 %v1150, %v1148
  %v1211 = vpack.c.b16 %v1151, %v1149
  %v1212 = vpack.c.b16 %v1154, %v1152
  %v1213 = vpack.c.b16 %v1155, %v1153
  %v1214 = vpack.c.b16 %v1158, %v1156
  %v1215 = vpack.c.b16 %v1159, %v1157
  %v1216 = vpack.c.b16 %v1162, %v1160
  %v1217 = vpack.c.b16 %v1163, %v1161
  %v1218 = vpack.c.b16 %v1166, %v1164
  %v1219 = vpack.c.b16 %v1167, %v1165
  %v1220 = vpack.c.b16 %v1170, %v1168
  %v1221 = vpack.c.b16 %v1171, %v1169
  %v1222 = vpack.c.b16 %v1174, %v1172
  %v1223 = vpack.c.b16 %v1175, %v1173
  %v1224 = vpack.c.b16 %v1178, %v1176
  %v1225 = vpack.c.b16 %v1179, %v1177
  %v1226 = vpack.c.b16 %v1182, %v1180
  %v1227 = vpack.c.b16 %v1183, %v1181
  %v1228 = vpack.c.b16 %v1186, %v1184
  %v1229 = vpack.c.b16 %v1187, %v1185
  %v1230 = vpack.c.b16 %v1190, %v1188
  %v1231 = vpack.c.b16 %v1191, %v1189
  %v1232 = vpack.c.b16 %v1194, %v1192
  %v1233 = vpack.c.b16 %v1195, %v1193
  %v1234 = vpack.c.b16 %v1198, %v1196
  %v1235 = vpack.c.b16 %v1199, %v1197
  %v1236 = vpack.c.b16 %v1202, %v1200
  %v1237 = vpack.c.b16 %v1203, %v1201
  %v1238 = vpack.c.b16 %v1206, %v1204
  %v1239 = vpack.c.b16 %v1207, %v1205
  %1272 = vmatprep.subr.bf16.mxu0 %v1209
  %1273 = vmatpush1.bf16.msra.mxu0 %v1208
  %1274 = vmatprep.subr.bf16.mxu0 %v1211
  %1275 = vmatpush1.bf16.msra.mxu0 %v1210
  %1276 = vmatprep.subr.bf16.mxu0 %v1213
  %1277 = vmatpush1.bf16.msra.mxu0 %v1212
  %1278 = vmatprep.subr.bf16.mxu0 %v1215
  %1279 = vmatpush1.bf16.msra.mxu0 %v1214
  %1280 = vmatprep.subr.bf16.mxu0 %v1217
  %1281 = vmatpush1.bf16.msra.mxu0 %v1216
  %1282 = vmatprep.subr.bf16.mxu0 %v1219
  %1283 = vmatpush1.bf16.msra.mxu0 %v1218
  %1284 = vmatprep.subr.bf16.mxu0 %v1221
  %1285 = vmatpush1.bf16.msra.mxu0 %v1220
  %1286 = vmatprep.subr.bf16.mxu0 %v1223
  %1287 = vmatpush1.bf16.msra.mxu0 %v1222
  %1288 = vmatprep.subr.bf16.mxu0 %v1225
  %1289 = vmatpush1.bf16.msra.mxu0 %v1224
  %1290 = vmatprep.subr.bf16.mxu0 %v1227
  %1291 = vmatpush1.bf16.msra.mxu0 %v1226
  %1292 = vmatprep.subr.bf16.mxu0 %v1229
  %1293 = vmatpush1.bf16.msra.mxu0 %v1228
  %1294 = vmatprep.subr.bf16.mxu0 %v1231
  %1295 = vmatpush1.bf16.msra.mxu0 %v1230
  %1296 = vmatprep.subr.bf16.mxu0 %v1233
  %1297 = vmatpush1.bf16.msra.mxu0 %v1232
  %1298 = vmatprep.subr.bf16.mxu0 %v1235
  %1299 = vmatpush1.bf16.msra.mxu0 %v1234
  %1300 = vmatprep.subr.bf16.mxu0 %v1237
  %1301 = vmatpush1.bf16.msra.mxu0 %v1236
  %1302 = vmatprep.subr.bf16.mxu0 %v1239
  %1303 = vmatpush1.bf16.msra.mxu0 %v1238
  %1304 = vmatprep.mubr.bf16.mxu0 %v1037
  %1305 = vmatmul.mubr.bf16.gmra.mrb[0].mxu0 %v1036
  %v1306 = vpop.f32.mrb[0].mxu0
  %v1307 = vadd.f32 %v1105, %v1306
  %v1308 = vpop.f32.mrb[0].mxu0
  %v1309 = vadd.f32 %v1109, %v1308
  %v1310 = vpop.f32.mrb[0].mxu0
  %v1311 = vadd.f32 %v1105, %v1310
  %v1312 = vpop.f32.mrb[0].mxu0
  %v1313 = vadd.f32 %v1109, %v1312
  %1314 = vmatprep.mubr.bf16.mxu0 %v1039
  %1315 = vmatmul.mubr.bf16.gmra.mrb[0].mxu0 %v1038
  %v1316 = vpop.f32.mrb[0].mxu0
  %v1317 = vadd.f32 %v1105, %v1316
  %v1318 = vpop.f32.mrb[0].mxu0
  %v1319 = vadd.f32 %v1109, %v1318
  %v1320 = vpop.f32.mrb[0].mxu0
  %v1321 = vadd.f32 %v1105, %v1320
  %v1322 = vpop.f32.mrb[0].mxu0
  %v1323 = vadd.f32 %v1109, %v1322
  %1324 = vmatprep.mubr.bf16.mxu0 %v1041
  %1325 = vmatmul.mubr.bf16.gmra.mrb[0].mxu0 %v1040
  %v1326 = vpop.f32.mrb[0].mxu0
  %v1327 = vadd.f32 %v1105, %v1326
  %v1328 = vpop.f32.mrb[0].mxu0
  %v1329 = vadd.f32 %v1109, %v1328
  %v1330 = vpop.f32.mrb[0].mxu0
  %v1331 = vadd.f32 %v1105, %v1330
  %v1332 = vpop.f32.mrb[0].mxu0
  %v1333 = vadd.f32 %v1109, %v1332
  %1334 = vmatprep.mubr.bf16.mxu0 %v1043
  %1335 = vmatmul.mubr.bf16.gmra.mrb[0].mxu0 %v1042
  %v1336 = vpop.f32.mrb[0].mxu0
  %v1337 = vadd.f32 %v1105, %v1336
  %v1338 = vpop.f32.mrb[0].mxu0
  %v1339 = vadd.f32 %v1109, %v1338
  %v1340 = vpop.f32.mrb[0].mxu0
  %v1341 = vadd.f32 %v1105, %v1340
  %v1342 = vpop.f32.mrb[0].mxu0
  %v1343 = vadd.f32 %v1109, %v1342
  %1344 = vmatprep.mubr.bf16.mxu0 %v1045
  %1345 = vmatmul.mubr.bf16.gmra.mrb[0].mxu0 %v1044
  %v1346 = vpop.f32.mrb[0].mxu0
  %v1347 = vadd.f32 %v1105, %v1346
  %v1348 = vpop.f32.mrb[0].mxu0
  %v1349 = vadd.f32 %v1109, %v1348
  %v1350 = vpop.f32.mrb[0].mxu0
  %v1351 = vadd.f32 %v1105, %v1350
  %v1352 = vpop.f32.mrb[0].mxu0
  %v1353 = vadd.f32 %v1109, %v1352
  %1354 = vmatprep.mubr.bf16.mxu0 %v1047
  %1355 = vmatmul.mubr.bf16.gmra.mrb[0].mxu0 %v1046
  %v1356 = vpop.f32.mrb[0].mxu0
  %v1357 = vadd.f32 %v1105, %v1356
  %v1358 = vpop.f32.mrb[0].mxu0
  %v1359 = vadd.f32 %v1109, %v1358
  %v1360 = vpop.f32.mrb[0].mxu0
  %v1361 = vadd.f32 %v1105, %v1360
  %v1362 = vpop.f32.mrb[0].mxu0
  %v1363 = vadd.f32 %v1109, %v1362
  %1364 = vmatprep.mubr.bf16.mxu0 %v1049
  %1365 = vmatmul.mubr.bf16.gmra.mrb[0].mxu0 %v1048
  %v1366 = vpop.f32.mrb[0].mxu0
  %v1367 = vadd.f32 %v1105, %v1366
  %v1368 = vpop.f32.mrb[0].mxu0
  %v1369 = vadd.f32 %v1109, %v1368
  %v1370 = vpop.f32.mrb[0].mxu0
  %v1371 = vadd.f32 %v1105, %v1370
  %v1372 = vpop.f32.mrb[0].mxu0
  %v1373 = vadd.f32 %v1109, %v1372
  %1374 = vmatprep.mubr.bf16.mxu0 %v1051
  %1375 = vmatmul.mubr.bf16.gmra.mrb[0].mxu0 %v1050
  %v1376 = vpop.f32.mrb[0].mxu0
  %v1377 = vadd.f32 %v1105, %v1376
  %v1378 = vpop.f32.mrb[0].mxu0
  %v1379 = vadd.f32 %v1109, %v1378
  %v1380 = vpop.f32.mrb[0].mxu0
  %v1381 = vadd.f32 %v1105, %v1380
  %v1382 = vpop.f32.mrb[0].mxu0
  %v1383 = vadd.f32 %v1109, %v1382
  %1384 = vmatprep.mubr.bf16.mxu0 %v1053
  %1385 = vmatmul.mubr.bf16.gmra.mrb[0].mxu0 %v1052
  %v1386 = vpop.f32.mrb[0].mxu0
  %v1387 = vadd.f32 %v1105, %v1386
  %v1388 = vpop.f32.mrb[0].mxu0
  %v1389 = vadd.f32 %v1109, %v1388
  %v1390 = vpop.f32.mrb[0].mxu0
  %v1391 = vadd.f32 %v1105, %v1390
  %v1392 = vpop.f32.mrb[0].mxu0
  %v1393 = vadd.f32 %v1109, %v1392
  %1394 = vmatprep.mubr.bf16.mxu0 %v1055
  %1395 = vmatmul.mubr.bf16.gmra.mrb[0].mxu0 %v1054
  %v1396 = vpop.f32.mrb[0].mxu0
  %v1397 = vadd.f32 %v1105, %v1396
  %v1398 = vpop.f32.mrb[0].mxu0
  %v1399 = vadd.f32 %v1109, %v1398
  %v1400 = vpop.f32.mrb[0].mxu0
  %v1401 = vadd.f32 %v1105, %v1400
  %v1402 = vpop.f32.mrb[0].mxu0
  %v1403 = vadd.f32 %v1109, %v1402
  %1404 = vmatprep.mubr.bf16.mxu0 %v1057
  %1405 = vmatmul.mubr.bf16.gmra.mrb[0].mxu0 %v1056
  %v1406 = vpop.f32.mrb[0].mxu0
  %v1407 = vadd.f32 %v1105, %v1406
  %v1408 = vpop.f32.mrb[0].mxu0
  %v1409 = vadd.f32 %v1109, %v1408
  %v1410 = vpop.f32.mrb[0].mxu0
  %v1411 = vadd.f32 %v1105, %v1410
  %v1412 = vpop.f32.mrb[0].mxu0
  %v1413 = vadd.f32 %v1109, %v1412
  %1414 = vmatprep.mubr.bf16.mxu0 %v1059
  %1415 = vmatmul.mubr.bf16.gmra.mrb[0].mxu0 %v1058
  %v1416 = vpop.f32.mrb[0].mxu0
  %v1417 = vadd.f32 %v1105, %v1416
  %v1418 = vpop.f32.mrb[0].mxu0
  %v1419 = vadd.f32 %v1109, %v1418
  %v1420 = vpop.f32.mrb[0].mxu0
  %v1421 = vadd.f32 %v1105, %v1420
  %v1422 = vpop.f32.mrb[0].mxu0
  %v1423 = vadd.f32 %v1109, %v1422
  %1424 = vmatprep.mubr.bf16.mxu0 %v1061
  %1425 = vmatmul.mubr.bf16.gmra.mrb[0].mxu0 %v1060
  %v1426 = vpop.f32.mrb[0].mxu0
  %v1427 = vadd.f32 %v1105, %v1426
  %v1428 = vpop.f32.mrb[0].mxu0
  %v1429 = vadd.f32 %v1109, %v1428
  %v1430 = vpop.f32.mrb[0].mxu0
  %v1431 = vadd.f32 %v1105, %v1430
  %v1432 = vpop.f32.mrb[0].mxu0
  %v1433 = vadd.f32 %v1109, %v1432
  %1434 = vmatprep.mubr.bf16.mxu0 %v1063
  %1435 = vmatmul.mubr.bf16.gmra.mrb[0].mxu0 %v1062
  %v1436 = vpop.f32.mrb[0].mxu0
  %v1437 = vadd.f32 %v1105, %v1436
  %v1438 = vpop.f32.mrb[0].mxu0
  %v1439 = vadd.f32 %v1109, %v1438
  %v1440 = vpop.f32.mrb[0].mxu0
  %v1441 = vadd.f32 %v1105, %v1440
  %v1442 = vpop.f32.mrb[0].mxu0
  %v1443 = vadd.f32 %v1109, %v1442
  %1444 = vmatprep.mubr.bf16.mxu0 %v1065
  %1445 = vmatmul.mubr.bf16.gmra.mrb[0].mxu0 %v1064
  %v1446 = vpop.f32.mrb[0].mxu0
  %v1447 = vadd.f32 %v1105, %v1446
  %v1448 = vpop.f32.mrb[0].mxu0
  %v1449 = vadd.f32 %v1109, %v1448
  %v1450 = vpop.f32.mrb[0].mxu0
  %v1451 = vadd.f32 %v1105, %v1450
  %v1452 = vpop.f32.mrb[0].mxu0
  %v1453 = vadd.f32 %v1109, %v1452
  %1454 = vmatprep.mubr.bf16.mxu0 %v1067
  %1455 = vmatmul.mubr.bf16.gmra.mrb[0].mxu0 %v1066
  %v1456 = vpop.f32.mrb[0].mxu0
  %v1457 = vadd.f32 %v1105, %v1456
  %v1458 = vpop.f32.mrb[0].mxu0
  %v1459 = vadd.f32 %v1109, %v1458
  %v1460 = vpop.f32.mrb[0].mxu0
  %v1461 = vadd.f32 %v1105, %v1460
  %v1462 = vpop.f32.mrb[0].mxu0
  %v1463 = vadd.f32 %v1109, %v1462
  %1464 = vdwg.mxu0
  %v1465 = vmax.f32 %v1307, 0.0
  %v1466 = vmax.f32 %v1309, 0.0
  %v1467 = vmax.f32 %v1311, 0.0
  %v1468 = vmax.f32 %v1313, 0.0
  %v1469 = vmax.f32 %v1317, 0.0
  %v1470 = vmax.f32 %v1319, 0.0
  %v1471 = vmax.f32 %v1321, 0.0
  %v1472 = vmax.f32 %v1323, 0.0
  %v1473 = vmax.f32 %v1327, 0.0
  %v1474 = vmax.f32 %v1329, 0.0
  %v1475 = vmax.f32 %v1331, 0.0
  %v1476 = vmax.f32 %v1333, 0.0
  %v1477 = vmax.f32 %v1337, 0.0
  %v1478 = vmax.f32 %v1339, 0.0
  %v1479 = vmax.f32 %v1341, 0.0
  %v1480 = vmax.f32 %v1343, 0.0
  %v1481 = vmax.f32 %v1347, 0.0
  %v1482 = vmax.f32 %v1349, 0.0
  %v1483 = vmax.f32 %v1351, 0.0
  %v1484 = vmax.f32 %v1353, 0.0
  %v1485 = vmax.f32 %v1357, 0.0
  %v1486 = vmax.f32 %v1359, 0.0
  %v1487 = vmax.f32 %v1361, 0.0
  %v1488 = vmax.f32 %v1363, 0.0
  %v1489 = vmax.f32 %v1367, 0.0
  %v1490 = vmax.f32 %v1369, 0.0
  %v1491 = vmax.f32 %v1371, 0.0
  %v1492 = vmax.f32 %v1373, 0.0
  %v1493 = vmax.f32 %v1377, 0.0
  %v1494 = vmax.f32 %v1379, 0.0
  %v1495 = vmax.f32 %v1381, 0.0
  %v1496 = vmax.f32 %v1383, 0.0
  %v1497 = vmax.f32 %v1387, 0.0
  %v1498 = vmax.f32 %v1389, 0.0
  %v1499 = vmax.f32 %v1391, 0.0
  %v1500 = vmax.f32 %v1393, 0.0
  %v1501 = vmax.f32 %v1397, 0.0
  %v1502 = vmax.f32 %v1399, 0.0
  %v1503 = vmax.f32 %v1401, 0.0
  %v1504 = vmax.f32 %v1403, 0.0
  %v1505 = vmax.f32 %v1407, 0.0
  %v1506 = vmax.f32 %v1409, 0.0
  %v1507 = vmax.f32 %v1411, 0.0
  %v1508 = vmax.f32 %v1413, 0.0
  %v1509 = vmax.f32 %v1417, 0.0
  %v1510 = vmax.f32 %v1419, 0.0
  %v1511 = vmax.f32 %v1421, 0.0
  %v1512 = vmax.f32 %v1423, 0.0
  %v1513 = vmax.f32 %v1427, 0.0
  %v1514 = vmax.f32 %v1429, 0.0
  %v1515 = vmax.f32 %v1431, 0.0
  %v1516 = vmax.f32 %v1433, 0.0
  %v1517 = vmax.f32 %v1437, 0.0
  %v1518 = vmax.f32 %v1439, 0.0
  %v1519 = vmax.f32 %v1441, 0.0
  %v1520 = vmax.f32 %v1443, 0.0
  %v1521 = vmax.f32 %v1447, 0.0
  %v1522 = vmax.f32 %v1449, 0.0
  %v1523 = vmax.f32 %v1451, 0.0
  %v1524 = vmax.f32 %v1453, 0.0
  %v1525 = vmax.f32 %v1457, 0.0
  %v1526 = vmax.f32 %v1459, 0.0
  %v1527 = vmax.f32 %v1461, 0.0
  %v1528 = vmax.f32 %v1463, 0.0
  %v1529 = vpack.c.bf16 %v1467, %v1465
  %v1530 = vpack.c.bf16 %v1468, %v1466
  %v1531 = vpack.c.bf16 %v1471, %v1469
  %v1532 = vpack.c.bf16 %v1472, %v1470
  %v1533 = vpack.c.bf16 %v1475, %v1473
  %v1534 = vpack.c.bf16 %v1476, %v1474
  %v1535 = vpack.c.bf16 %v1479, %v1477
  %v1536 = vpack.c.bf16 %v1480, %v1478
  %v1537 = vpack.c.bf16 %v1483, %v1481
  %v1538 = vpack.c.bf16 %v1484, %v1482
  %v1539 = vpack.c.bf16 %v1487, %v1485
  %v1540 = vpack.c.bf16 %v1488, %v1486
  %v1541 = vpack.c.bf16 %v1491, %v1489
  %v1542 = vpack.c.bf16 %v1492, %v1490
  %v1543 = vpack.c.bf16 %v1495, %v1493
  %v1544 = vpack.c.bf16 %v1496, %v1494
  %v1545 = vpack.c.bf16 %v1499, %v1497
  %v1546 = vpack.c.bf16 %v1500, %v1498
  %v1547 = vpack.c.bf16 %v1503, %v1501
  %v1548 = vpack.c.bf16 %v1504, %v1502
  %v1549 = vpack.c.bf16 %v1507, %v1505
  %v1550 = vpack.c.bf16 %v1508, %v1506
  %v1551 = vpack.c.bf16 %v1511, %v1509
  %v1552 = vpack.c.bf16 %v1512, %v1510
  %v1553 = vpack.c.bf16 %v1515, %v1513
  %v1554 = vpack.c.bf16 %v1516, %v1514
  %v1555 = vpack.c.bf16 %v1519, %v1517
  %v1556 = vpack.c.bf16 %v1520, %v1518
  %v1557 = vpack.c.bf16 %v1523, %v1521
  %v1558 = vpack.c.bf16 %v1524, %v1522
  %v1559 = vpack.c.bf16 %v1527, %v1525
  %v1560 = vpack.c.bf16 %v1528, %v1526
  %v1561 = vld [vmem:[%s7] sm:$0xf]
  %v1562 = vld [vmem:[%s7 + $0x4] sm:$0xf]
  %v1563 = vld [vmem:[%s7 + $0x8] sm:$0xf]
  %v1564 = vld [vmem:[%s7 + $0xc] sm:$0xf]
  %v1565 = vld [vmem:[%s7 + $0x10] sm:$0xf]
  %v1566 = vld [vmem:[%s7 + $0x14] sm:$0xf]
  %v1567 = vld [vmem:[%s7 + $0x18] sm:$0xf]
  %v1568 = vld [vmem:[%s7 + $0x1c] sm:$0xf]
  %v1569 = vld [vmem:[%s7 + $0x20] sm:$0xf]
  %v1570 = vld [vmem:[%s7 + $0x24] sm:$0xf]
  %v1571 = vld [vmem:[%s7 + $0x28] sm:$0xf]
  %v1572 = vld [vmem:[%s7 + $0x2c] sm:$0xf]
  %v1573 = vld [vmem:[%s7 + $0x30] sm:$0xf]
  %v1574 = vld [vmem:[%s7 + $0x34] sm:$0xf]
  %v1575 = vld [vmem:[%s7 + $0x38] sm:$0xf]
  %v1576 = vld [vmem:[%s7 + $0x3c] sm:$0xf]
  %v1577 = vld [vmem:[%s7 + $0x40] sm:$0xf]
  %v1578 = vld [vmem:[%s7 + $0x44] sm:$0xf]
  %v1579 = vld [vmem:[%s7 + $0x48] sm:$0xf]
  %v1580 = vld [vmem:[%s7 + $0x4c] sm:$0xf]
  %v1581 = vld [vmem:[%s7 + $0x50] sm:$0xf]
  %v1582 = vld [vmem:[%s7 + $0x54] sm:$0xf]
  %v1583 = vld [vmem:[%s7 + $0x58] sm:$0xf]
  %v1584 = vld [vmem:[%s7 + $0x5c] sm:$0xf]
  %v1585 = vld [vmem:[%s7 + $0x60] sm:$0xf]
  %v1586 = vld [vmem:[%s7 + $0x64] sm:$0xf]
  %v1587 = vld [vmem:[%s7 + $0x68] sm:$0xf]
  %v1588 = vld [vmem:[%s7 + $0x6c] sm:$0xf]
  %v1589 = vld [vmem:[%s7 + $0x70] sm:$0xf]
  %v1590 = vld [vmem:[%s7 + $0x74] sm:$0xf]
  %v1591 = vld [vmem:[%s7 + $0x78] sm:$0xf]
  %v1592 = vld [vmem:[%s7 + $0x7c] sm:$0xf]
  %v1593 = vld [vmem:[%s8] sm:$0x1]
  %v1595 = vlaneseq
  %v1596 = vshrl.u32 %v1595, 7
  %v1597 = vsub.s32 0, %v1596
  %v1598 = vrot.slane %v1593, %v1597
  %v1632 = vunpack.c.l.b16 %v1561
  %v1633 = vunpack.c.l.b16 %v1562
  %v1634 = vunpack.c.l.b16 %v1563
  %v1635 = vunpack.c.l.b16 %v1564
  %v1636 = vunpack.c.l.b16 %v1565
  %v1637 = vunpack.c.l.b16 %v1566
  %v1638 = vunpack.c.l.b16 %v1567
  %v1639 = vunpack.c.l.b16 %v1568
  %v1640 = vunpack.c.l.b16 %v1569
  %v1641 = vunpack.c.l.b16 %v1570
  %v1642 = vunpack.c.l.b16 %v1571
  %v1643 = vunpack.c.l.b16 %v1572
  %v1644 = vunpack.c.l.b16 %v1573
  %v1645 = vunpack.c.l.b16 %v1574
  %v1646 = vunpack.c.l.b16 %v1575
  %v1647 = vunpack.c.l.b16 %v1576
  %v1648 = vunpack.c.l.b16 %v1577
  %v1649 = vunpack.c.l.b16 %v1578
  %v1650 = vunpack.c.l.b16 %v1579
  %v1651 = vunpack.c.l.b16 %v1580
  %v1652 = vunpack.c.l.b16 %v1581
  %v1653 = vunpack.c.l.b16 %v1582
  %v1654 = vunpack.c.l.b16 %v1583
  %v1655 = vunpack.c.l.b16 %v1584
  %v1656 = vunpack.c.l.b16 %v1585
  %v1657 = vunpack.c.l.b16 %v1586
  %v1658 = vunpack.c.l.b16 %v1587
  %v1659 = vunpack.c.l.b16 %v1588
  %v1660 = vunpack.c.l.b16 %v1589
  %v1661 = vunpack.c.l.b16 %v1590
  %v1662 = vunpack.c.l.b16 %v1591
  %v1663 = vunpack.c.l.b16 %v1592
  %v1664 = vpack.c.b16 %v1633, %v1632
  %v1665 = vpack.c.b16 %v1635, %v1634
  %v1666 = vpack.c.b16 %v1637, %v1636
  %v1667 = vpack.c.b16 %v1639, %v1638
  %v1668 = vpack.c.b16 %v1641, %v1640
  %v1669 = vpack.c.b16 %v1643, %v1642
  %v1670 = vpack.c.b16 %v1645, %v1644
  %v1671 = vpack.c.b16 %v1647, %v1646
  %v1672 = vpack.c.b16 %v1649, %v1648
  %v1673 = vpack.c.b16 %v1651, %v1650
  %v1674 = vpack.c.b16 %v1653, %v1652
  %v1675 = vpack.c.b16 %v1655, %v1654
  %v1676 = vpack.c.b16 %v1657, %v1656
  %v1677 = vpack.c.b16 %v1659, %v1658
  %v1678 = vpack.c.b16 %v1661, %v1660
  %v1679 = vpack.c.b16 %v1663, %v1662
  %1696 = vmatprep.subr.bf16.mxu0 0
  %1697 = vmatpush1.bf16.msra.mxu0 %v1664
  %1698 = vmatprep.subr.bf16.mxu0 0
  %1699 = vmatpush1.bf16.msra.mxu0 %v1665
  %1700 = vmatprep.subr.bf16.mxu0 0
  %1701 = vmatpush1.bf16.msra.mxu0 %v1666
  %1702 = vmatprep.subr.bf16.mxu0 0
  %1703 = vmatpush1.bf16.msra.mxu0 %v1667
  %1704 = vmatprep.subr.bf16.mxu0 0
  %1705 = vmatpush1.bf16.msra.mxu0 %v1668
  %1706 = vmatprep.subr.bf16.mxu0 0
  %1707 = vmatpush1.bf16.msra.mxu0 %v1669
  %1708 = vmatprep.subr.bf16.mxu0 0
  %1709 = vmatpush1.bf16.msra.mxu0 %v1670
  %1710 = vmatprep.subr.bf16.mxu0 0
  %1711 = vmatpush1.bf16.msra.mxu0 %v1671
  %1712 = vmatprep.subr.bf16.mxu0 0
  %1713 = vmatpush1.bf16.msra.mxu0 %v1672
  %1714 = vmatprep.subr.bf16.mxu0 0
  %1715 = vmatpush1.bf16.msra.mxu0 %v1673
  %1716 = vmatprep.subr.bf16.mxu0 0
  %1717 = vmatpush1.bf16.msra.mxu0 %v1674
  %1718 = vmatprep.subr.bf16.mxu0 0
  %1719 = vmatpush1.bf16.msra.mxu0 %v1675
  %1720 = vmatprep.subr.bf16.mxu0 0
  %1721 = vmatpush1.bf16.msra.mxu0 %v1676
  %1722 = vmatprep.subr.bf16.mxu0 0
  %1723 = vmatpush1.bf16.msra.mxu0 %v1677
  %1724 = vmatprep.subr.bf16.mxu0 0
  %1725 = vmatpush1.bf16.msra.mxu0 %v1678
  %1726 = vmatprep.subr.bf16.mxu0 0
  %1727 = vmatpush1.bf16.msra.mxu0 %v1679
  %1728 = vmatprep.mubr.bf16.mxu0 %v1530
  %1729 = vmatmul.mubr.bf16.gmra.mrb[0].mxu0 %v1529
  %v1730 = vpop.f32.mrb[0].mxu0
  %v1731 = vadd.f32 %v1598, %v1730
  %v1732 = vpop.f32.mrb[0].mxu0
  %v1733 = vpop.f32.mrb[0].mxu0
  %v1734 = vadd.f32 %v1598, %v1733
  %v1735 = vpop.f32.mrb[0].mxu0
  %1736 = vmatprep.mubr.bf16.mxu0 %v1532
  %1737 = vmatmul.mubr.bf16.gmra.mrb[0].mxu0 %v1531
  %v1738 = vpop.f32.mrb[0].mxu0
  %v1739 = vadd.f32 %v1598, %v1738
  %v1740 = vpop.f32.mrb[0].mxu0
  %v1741 = vpop.f32.mrb[0].mxu0
  %v1742 = vadd.f32 %v1598, %v1741
  %v1743 = vpop.f32.mrb[0].mxu0
  %1744 = vmatprep.mubr.bf16.mxu0 %v1534
  %1745 = vmatmul.mubr.bf16.gmra.mrb[0].mxu0 %v1533
  %v1746 = vpop.f32.mrb[0].mxu0
  %v1747 = vadd.f32 %v1598, %v1746
  %v1748 = vpop.f32.mrb[0].mxu0
  %v1749 = vpop.f32.mrb[0].mxu0
  %v1750 = vadd.f32 %v1598, %v1749
  %v1751 = vpop.f32.mrb[0].mxu0
  %1752 = vmatprep.mubr.bf16.mxu0 %v1536
  %1753 = vmatmul.mubr.bf16.gmra.mrb[0].mxu0 %v1535
  %v1754 = vpop.f32.mrb[0].mxu0
  %v1755 = vadd.f32 %v1598, %v1754
  %v1756 = vpop.f32.mrb[0].mxu0
  %v1757 = vpop.f32.mrb[0].mxu0
  %v1758 = vadd.f32 %v1598, %v1757
  %v1759 = vpop.f32.mrb[0].mxu0
  %1760 = vmatprep.mubr.bf16.mxu0 %v1538
  %1761 = vmatmul.mubr.bf16.gmra.mrb[0].mxu0 %v1537
  %v1762 = vpop.f32.mrb[0].mxu0
  %v1763 = vadd.f32 %v1598, %v1762
  %v1764 = vpop.f32.mrb[0].mxu0
  %v1765 = vpop.f32.mrb[0].mxu0
  %v1766 = vadd.f32 %v1598, %v1765
  %v1767 = vpop.f32.mrb[0].mxu0
  %1768 = vmatprep.mubr.bf16.mxu0 %v1540
  %1769 = vmatmul.mubr.bf16.gmra.mrb[0].mxu0 %v1539
  %v1770 = vpop.f32.mrb[0].mxu0
  %v1771 = vadd.f32 %v1598, %v1770
  %v1772 = vpop.f32.mrb[0].mxu0
  %v1773 = vpop.f32.mrb[0].mxu0
  %v1774 = vadd.f32 %v1598, %v1773
  %v1775 = vpop.f32.mrb[0].mxu0
  %1776 = vmatprep.mubr.bf16.mxu0 %v1542
  %1777 = vmatmul.mubr.bf16.gmra.mrb[0].mxu0 %v1541
  %v1778 = vpop.f32.mrb[0].mxu0
  %v1779 = vadd.f32 %v1598, %v1778
  %v1780 = vpop.f32.mrb[0].mxu0
  %v1781 = vpop.f32.mrb[0].mxu0
  %v1782 = vadd.f32 %v1598, %v1781
  %v1783 = vpop.f32.mrb[0].mxu0
  %1784 = vmatprep.mubr.bf16.mxu0 %v1544
  %1785 = vmatmul.mubr.bf16.gmra.mrb[0].mxu0 %v1543
  %v1786 = vpop.f32.mrb[0].mxu0
  %v1787 = vadd.f32 %v1598, %v1786
  %v1788 = vpop.f32.mrb[0].mxu0
  %v1789 = vpop.f32.mrb[0].mxu0
  %v1790 = vadd.f32 %v1598, %v1789
  %v1791 = vpop.f32.mrb[0].mxu0
  %1792 = vmatprep.mubr.bf16.mxu0 %v1546
  %1793 = vmatmul.mubr.bf16.gmra.mrb[0].mxu0 %v1545
  %v1794 = vpop.f32.mrb[0].mxu0
  %v1795 = vadd.f32 %v1598, %v1794
  %v1796 = vpop.f32.mrb[0].mxu0
  %v1797 = vpop.f32.mrb[0].mxu0
  %v1798 = vadd.f32 %v1598, %v1797
  %v1799 = vpop.f32.mrb[0].mxu0
  %1800 = vmatprep.mubr.bf16.mxu0 %v1548
  %1801 = vmatmul.mubr.bf16.gmra.mrb[0].mxu0 %v1547
  %v1802 = vpop.f32.mrb[0].mxu0
  %v1803 = vadd.f32 %v1598, %v1802
  %v1804 = vpop.f32.mrb[0].mxu0
  %v1805 = vpop.f32.mrb[0].mxu0
  %v1806 = vadd.f32 %v1598, %v1805
  %v1807 = vpop.f32.mrb[0].mxu0
  %1808 = vmatprep.mubr.bf16.mxu0 %v1550
  %1809 = vmatmul.mubr.bf16.gmra.mrb[0].mxu0 %v1549
  %v1810 = vpop.f32.mrb[0].mxu0
  %v1811 = vadd.f32 %v1598, %v1810
  %v1812 = vpop.f32.mrb[0].mxu0
  %v1813 = vpop.f32.mrb[0].mxu0
  %v1814 = vadd.f32 %v1598, %v1813
  %v1815 = vpop.f32.mrb[0].mxu0
  %1816 = vmatprep.mubr.bf16.mxu0 %v1552
  %1817 = vmatmul.mubr.bf16.gmra.mrb[0].mxu0 %v1551
  %v1818 = vpop.f32.mrb[0].mxu0
  %v1819 = vadd.f32 %v1598, %v1818
  %v1820 = vpop.f32.mrb[0].mxu0
  %v1821 = vpop.f32.mrb[0].mxu0
  %v1822 = vadd.f32 %v1598, %v1821
  %v1823 = vpop.f32.mrb[0].mxu0
  %1824 = vmatprep.mubr.bf16.mxu0 %v1554
  %1825 = vmatmul.mubr.bf16.gmra.mrb[0].mxu0 %v1553
  %v1826 = vpop.f32.mrb[0].mxu0
  %v1827 = vadd.f32 %v1598, %v1826
  %v1828 = vpop.f32.mrb[0].mxu0
  %v1829 = vpop.f32.mrb[0].mxu0
  %v1830 = vadd.f32 %v1598, %v1829
  %v1831 = vpop.f32.mrb[0].mxu0
  %1832 = vmatprep.mubr.bf16.mxu0 %v1556
  %1833 = vmatmul.mubr.bf16.gmra.mrb[0].mxu0 %v1555
  %v1834 = vpop.f32.mrb[0].mxu0
  %v1835 = vadd.f32 %v1598, %v1834
  %v1836 = vpop.f32.mrb[0].mxu0
  %v1837 = vpop.f32.mrb[0].mxu0
  %v1838 = vadd.f32 %v1598, %v1837
  %v1839 = vpop.f32.mrb[0].mxu0
  %1840 = vmatprep.mubr.bf16.mxu0 %v1558
  %1841 = vmatmul.mubr.bf16.gmra.mrb[0].mxu0 %v1557
  %v1842 = vpop.f32.mrb[0].mxu0
  %v1843 = vadd.f32 %v1598, %v1842
  %v1844 = vpop.f32.mrb[0].mxu0
  %v1845 = vpop.f32.mrb[0].mxu0
  %v1846 = vadd.f32 %v1598, %v1845
  %v1847 = vpop.f32.mrb[0].mxu0
  %1848 = vmatprep.mubr.bf16.mxu0 %v1560
  %1849 = vmatmul.mubr.bf16.gmra.mrb[0].mxu0 %v1559
  %v1850 = vpop.f32.mrb[0].mxu0
  %v1851 = vadd.f32 %v1598, %v1850
  %v1852 = vpop.f32.mrb[0].mxu0
  %v1853 = vpop.f32.mrb[0].mxu0
  %v1854 = vadd.f32 %v1598, %v1853
  %v1855 = vpop.f32.mrb[0].mxu0
  %1856 = vdwg.mxu0
  %v1857 = vmax.f32 %v1731, 0.0
  %v1858 = vmax.f32 %v1734, 0.0
  %v1859 = vmax.f32 %v1739, 0.0
  %v1860 = vmax.f32 %v1742, 0.0
  %v1861 = vmax.f32 %v1747, 0.0
  %v1862 = vmax.f32 %v1750, 0.0
  %v1863 = vmax.f32 %v1755, 0.0
  %v1864 = vmax.f32 %v1758, 0.0
  %v1865 = vmax.f32 %v1763, 0.0
  %v1866 = vmax.f32 %v1766, 0.0
  %v1867 = vmax.f32 %v1771, 0.0
  %v1868 = vmax.f32 %v1774, 0.0
  %v1869 = vmax.f32 %v1779, 0.0
  %v1870 = vmax.f32 %v1782, 0.0
  %v1871 = vmax.f32 %v1787, 0.0
  %v1872 = vmax.f32 %v1790, 0.0
  %v1873 = vmax.f32 %v1795, 0.0
  %v1874 = vmax.f32 %v1798, 0.0
  %v1875 = vmax.f32 %v1803, 0.0
  %v1876 = vmax.f32 %v1806, 0.0
  %v1877 = vmax.f32 %v1811, 0.0
  %v1878 = vmax.f32 %v1814, 0.0
  %v1879 = vmax.f32 %v1819, 0.0
  %v1880 = vmax.f32 %v1822, 0.0
  %v1881 = vmax.f32 %v1827, 0.0
  %v1882 = vmax.f32 %v1830, 0.0
  %v1883 = vmax.f32 %v1835, 0.0
  %v1884 = vmax.f32 %v1838, 0.0
  %v1885 = vmax.f32 %v1843, 0.0
  %v1886 = vmax.f32 %v1846, 0.0
  %v1887 = vmax.f32 %v1851, 0.0
  %v1888 = vmax.f32 %v1854, 0.0
  %v1889 = vpack.c.bf16 %v1858, %v1857
  %v1890 = vpack.c.bf16 %v1860, %v1859
  %v1891 = vpack.c.bf16 %v1862, %v1861
  %v1892 = vpack.c.bf16 %v1864, %v1863
  %v1893 = vpack.c.bf16 %v1866, %v1865
  %v1894 = vpack.c.bf16 %v1868, %v1867
  %v1895 = vpack.c.bf16 %v1870, %v1869
  %v1896 = vpack.c.bf16 %v1872, %v1871
  %v1897 = vpack.c.bf16 %v1874, %v1873
  %v1898 = vpack.c.bf16 %v1876, %v1875
  %v1899 = vpack.c.bf16 %v1878, %v1877
  %v1900 = vpack.c.bf16 %v1880, %v1879
  %v1901 = vpack.c.bf16 %v1882, %v1881
  %v1902 = vpack.c.bf16 %v1884, %v1883
  %v1903 = vpack.c.bf16 %v1886, %v1885
  %v1904 = vpack.c.bf16 %v1888, %v1887
  %v1905 = vld [vmem:[%s9] sm:$0xf]
  %v1906 = vld [vmem:[%s9 + $0x4] sm:$0xf]
  %v1907 = vld [vmem:[%s9 + $0x8] sm:$0xf]
  %v1908 = vld [vmem:[%s9 + $0xc] sm:$0xf]
  %v1909 = vld [vmem:[%s9 + $0x10] sm:$0xf]
  %v1910 = vld [vmem:[%s9 + $0x14] sm:$0xf]
  %v1911 = vld [vmem:[%s9 + $0x18] sm:$0xf]
  %v1912 = vld [vmem:[%s9 + $0x1c] sm:$0xf]
  %v1913 = vld [vmem:[%s9 + $0x20] sm:$0xf]
  %v1914 = vld [vmem:[%s9 + $0x24] sm:$0xf]
  %v1915 = vld [vmem:[%s9 + $0x28] sm:$0xf]
  %v1916 = vld [vmem:[%s9 + $0x2c] sm:$0xf]
  %v1917 = vld [vmem:[%s9 + $0x30] sm:$0xf]
  %v1918 = vld [vmem:[%s9 + $0x34] sm:$0xf]
  %v1919 = vld [vmem:[%s9 + $0x38] sm:$0xf]
  %v1920 = vld [vmem:[%s9 + $0x3c] sm:$0xf]
  %v1921 = vld [vmem:[%s10] sm:$0x1]
  %v1923 = vlaneseq
  %v1924 = vshrl.u32 %v1923, 7
  %v1925 = vsub.s32 0, %v1924
  %v1926 = vrot.slane %v1921, %v1925
  %v1944 = vunpack.c.l.b16 %v1905
  %v1945 = vunpack.c.l.b16 %v1906
  %v1946 = vunpack.c.l.b16 %v1907
  %v1947 = vunpack.c.l.b16 %v1908
  %v1948 = vunpack.c.l.b16 %v1909
  %v1949 = vunpack.c.l.b16 %v1910
  %v1950 = vunpack.c.l.b16 %v1911
  %v1951 = vunpack.c.l.b16 %v1912
  %v1952 = vunpack.c.l.b16 %v1913
  %v1953 = vunpack.c.l.b16 %v1914
  %v1954 = vunpack.c.l.b16 %v1915
  %v1955 = vunpack.c.l.b16 %v1916
  %v1956 = vunpack.c.l.b16 %v1917
  %v1957 = vunpack.c.l.b16 %v1918
  %v1958 = vunpack.c.l.b16 %v1919
  %v1959 = vunpack.c.l.b16 %v1920
  %v1960 = vpack.c.b16 %v1945, %v1944
  %v1961 = vpack.c.b16 %v1947, %v1946
  %v1962 = vpack.c.b16 %v1949, %v1948
  %v1963 = vpack.c.b16 %v1951, %v1950
  %v1964 = vpack.c.b16 %v1953, %v1952
  %v1965 = vpack.c.b16 %v1955, %v1954
  %v1966 = vpack.c.b16 %v1957, %v1956
  %v1967 = vpack.c.b16 %v1959, %v1958
  %1976 = vmatprep.subr.bf16.mxu0 0
  %1977 = vmatpush1.bf16.msra.mxu0 %v1960
  %1978 = vmatprep.subr.bf16.mxu0 0
  %1979 = vmatpush1.bf16.msra.mxu0 %v1961
  %1980 = vmatprep.subr.bf16.mxu0 0
  %1981 = vmatpush1.bf16.msra.mxu0 %v1962
  %1982 = vmatprep.subr.bf16.mxu0 0
  %1983 = vmatpush1.bf16.msra.mxu0 %v1963
  %1984 = vmatprep.subr.bf16.mxu0 0
  %1985 = vmatpush1.bf16.msra.mxu0 %v1964
  %1986 = vmatprep.subr.bf16.mxu0 0
  %1987 = vmatpush1.bf16.msra.mxu0 %v1965
  %1988 = vmatprep.subr.bf16.mxu0 0
  %1989 = vmatpush1.bf16.msra.mxu0 %v1966
  %1990 = vmatprep.subr.bf16.mxu0 0
  %1991 = vmatpush1.bf16.msra.mxu0 %v1967
  %1992 = vmatprep.subr.bf16.mxu0 0
  %1993 = vmatpush1.bf16.msra.mxu0 0
  %1994 = vmatprep.subr.bf16.mxu0 0
  %1995 = vmatpush1.bf16.msra.mxu0 0
  %1996 = vmatprep.subr.bf16.mxu0 0
  %1997 = vmatpush1.bf16.msra.mxu0 0
  %1998 = vmatprep.subr.bf16.mxu0 0
  %1999 = vmatpush1.bf16.msra.mxu0 0
  %2000 = vmatprep.subr.bf16.mxu0 0
  %2001 = vmatpush1.bf16.msra.mxu0 0
  %2002 = vmatprep.subr.bf16.mxu0 0
  %2003 = vmatpush1.bf16.msra.mxu0 0
  %2004 = vmatprep.subr.bf16.mxu0 0
  %2005 = vmatpush1.bf16.msra.mxu0 0
  %2006 = vmatprep.subr.bf16.mxu0 0
  %2007 = vmatpush1.bf16.msra.mxu0 0
  %2008 = vmatprep.mubr.bf16.mxu0 0
  %2009 = vmatmul.mubr.bf16.gmra.mrb[0].mxu0 %v1889
  %v2010 = vpop.f32.mrb[0].mxu0
  %v2011 = vadd.f32 %v1926, %v2010
  %v2012 = vpop.f32.mrb[0].mxu0
  %v2013 = vpop.f32.mrb[0].mxu0
  %v2014 = vadd.f32 %v1926, %v2013
  %v2015 = vpop.f32.mrb[0].mxu0
  %2016 = vmatprep.mubr.bf16.mxu0 0
  %2017 = vmatmul.mubr.bf16.gmra.mrb[0].mxu0 %v1890
  %v2018 = vpop.f32.mrb[0].mxu0
  %v2019 = vadd.f32 %v1926, %v2018
  %v2020 = vpop.f32.mrb[0].mxu0
  %v2021 = vpop.f32.mrb[0].mxu0
  %v2022 = vadd.f32 %v1926, %v2021
  %v2023 = vpop.f32.mrb[0].mxu0
  %2024 = vmatprep.mubr.bf16.mxu0 0
  %2025 = vmatmul.mubr.bf16.gmra.mrb[0].mxu0 %v1891
  %v2026 = vpop.f32.mrb[0].mxu0
  %v2027 = vadd.f32 %v1926, %v2026
  %v2028 = vpop.f32.mrb[0].mxu0
  %v2029 = vpop.f32.mrb[0].mxu0
  %v2030 = vadd.f32 %v1926, %v2029
  %v2031 = vpop.f32.mrb[0].mxu0
  %2032 = vmatprep.mubr.bf16.mxu0 0
  %2033 = vmatmul.mubr.bf16.gmra.mrb[0].mxu0 %v1892
  %v2034 = vpop.f32.mrb[0].mxu0
  %v2035 = vadd.f32 %v1926, %v2034
  %v2036 = vpop.f32.mrb[0].mxu0
  %v2037 = vpop.f32.mrb[0].mxu0
  %v2038 = vadd.f32 %v1926, %v2037
  %v2039 = vpop.f32.mrb[0].mxu0
  %2040 = vmatprep.mubr.bf16.mxu0 0
  %2041 = vmatmul.mubr.bf16.gmra.mrb[0].mxu0 %v1893
  %v2042 = vpop.f32.mrb[0].mxu0
  %v2043 = vadd.f32 %v1926, %v2042
  %v2044 = vpop.f32.mrb[0].mxu0
  %v2045 = vpop.f32.mrb[0].mxu0
  %v2046 = vadd.f32 %v1926, %v2045
  %v2047 = vpop.f32.mrb[0].mxu0
  %2048 = vmatprep.mubr.bf16.mxu0 0
  %2049 = vmatmul.mubr.bf16.gmra.mrb[0].mxu0 %v1894
  %v2050 = vpop.f32.mrb[0].mxu0
  %v2051 = vadd.f32 %v1926, %v2050
  %v2052 = vpop.f32.mrb[0].mxu0
  %v2053 = vpop.f32.mrb[0].mxu0
  %v2054 = vadd.f32 %v1926, %v2053
  %v2055 = vpop.f32.mrb[0].mxu0
  %2056 = vmatprep.mubr.bf16.mxu0 0
  %2057 = vmatmul.mubr.bf16.gmra.mrb[0].mxu0 %v1895
  %v2058 = vpop.f32.mrb[0].mxu0
  %v2059 = vadd.f32 %v1926, %v2058
  %v2060 = vpop.f32.mrb[0].mxu0
  %v2061 = vpop.f32.mrb[0].mxu0
  %v2062 = vadd.f32 %v1926, %v2061
  %v2063 = vpop.f32.mrb[0].mxu0
  %2064 = vmatprep.mubr.bf16.mxu0 0
  %2065 = vmatmul.mubr.bf16.gmra.mrb[0].mxu0 %v1896
  %v2066 = vpop.f32.mrb[0].mxu0
  %v2067 = vadd.f32 %v1926, %v2066
  %v2068 = vpop.f32.mrb[0].mxu0
  %v2069 = vpop.f32.mrb[0].mxu0
  %v2070 = vadd.f32 %v1926, %v2069
  %v2071 = vpop.f32.mrb[0].mxu0
  %2072 = vmatprep.mubr.bf16.mxu0 0
  %2073 = vmatmul.mubr.bf16.gmra.mrb[0].mxu0 %v1897
  %v2074 = vpop.f32.mrb[0].mxu0
  %v2075 = vadd.f32 %v1926, %v2074
  %v2076 = vpop.f32.mrb[0].mxu0
  %v2077 = vpop.f32.mrb[0].mxu0
  %v2078 = vadd.f32 %v1926, %v2077
  %v2079 = vpop.f32.mrb[0].mxu0
  %2080 = vmatprep.mubr.bf16.mxu0 0
  %2081 = vmatmul.mubr.bf16.gmra.mrb[0].mxu0 %v1898
  %v2082 = vpop.f32.mrb[0].mxu0
  %v2083 = vadd.f32 %v1926, %v2082
  %v2084 = vpop.f32.mrb[0].mxu0
  %v2085 = vpop.f32.mrb[0].mxu0
  %v2086 = vadd.f32 %v1926, %v2085
  %v2087 = vpop.f32.mrb[0].mxu0
  %2088 = vmatprep.mubr.bf16.mxu0 0
  %2089 = vmatmul.mubr.bf16.gmra.mrb[0].mxu0 %v1899
  %v2090 = vpop.f32.mrb[0].mxu0
  %v2091 = vadd.f32 %v1926, %v2090
  %v2092 = vpop.f32.mrb[0].mxu0
  %v2093 = vpop.f32.mrb[0].mxu0
  %v2094 = vadd.f32 %v1926, %v2093
  %v2095 = vpop.f32.mrb[0].mxu0
  %2096 = vmatprep.mubr.bf16.mxu0 0
  %2097 = vmatmul.mubr.bf16.gmra.mrb[0].mxu0 %v1900
  %v2098 = vpop.f32.mrb[0].mxu0
  %v2099 = vadd.f32 %v1926, %v2098
  %v2100 = vpop.f32.mrb[0].mxu0
  %v2101 = vpop.f32.mrb[0].mxu0
  %v2102 = vadd.f32 %v1926, %v2101
  %v2103 = vpop.f32.mrb[0].mxu0
  %2104 = vmatprep.mubr.bf16.mxu0 0
  %2105 = vmatmul.mubr.bf16.gmra.mrb[0].mxu0 %v1901
  %v2106 = vpop.f32.mrb[0].mxu0
  %v2107 = vadd.f32 %v1926, %v2106
  %v2108 = vpop.f32.mrb[0].mxu0
  %v2109 = vpop.f32.mrb[0].mxu0
  %v2110 = vadd.f32 %v1926, %v2109
  %v2111 = vpop.f32.mrb[0].mxu0
  %2112 = vmatprep.mubr.bf16.mxu0 0
  %2113 = vmatmul.mubr.bf16.gmra.mrb[0].mxu0 %v1902
  %v2114 = vpop.f32.mrb[0].mxu0
  %v2115 = vadd.f32 %v1926, %v2114
  %v2116 = vpop.f32.mrb[0].mxu0
  %v2117 = vpop.f32.mrb[0].mxu0
  %v2118 = vadd.f32 %v1926, %v2117
  %v2119 = vpop.f32.mrb[0].mxu0
  %2120 = vmatprep.mubr.bf16.mxu0 0
  %2121 = vmatmul.mubr.bf16.gmra.mrb[0].mxu0 %v1903
  %v2122 = vpop.f32.mrb[0].mxu0
  %v2123 = vadd.f32 %v1926, %v2122
  %v2124 = vpop.f32.mrb[0].mxu0
  %v2125 = vpop.f32.mrb[0].mxu0
  %v2126 = vadd.f32 %v1926, %v2125
  %v2127 = vpop.f32.mrb[0].mxu0
  %2128 = vmatprep.mubr.bf16.mxu0 0
  %2129 = vmatmul.mubr.bf16.gmra.mrb[0].mxu0 %v1904
  %v2130 = vpop.f32.mrb[0].mxu0
  %v2131 = vadd.f32 %v1926, %v2130
  %v2132 = vpop.f32.mrb[0].mxu0
  %v2133 = vpop.f32.mrb[0].mxu0
  %v2134 = vadd.f32 %v1926, %v2133
  %v2135 = vpop.f32.mrb[0].mxu0
  %2136 = vdwg.mxu0
  %v2137 = vmax.f32 %v2011, 0.0
  %v2138 = vmax.f32 %v2014, 0.0
  %v2139 = vmax.f32 %v2019, 0.0
  %v2140 = vmax.f32 %v2022, 0.0
  %v2141 = vmax.f32 %v2027, 0.0
  %v2142 = vmax.f32 %v2030, 0.0
  %v2143 = vmax.f32 %v2035, 0.0
  %v2144 = vmax.f32 %v2038, 0.0
  %v2145 = vmax.f32 %v2043, 0.0
  %v2146 = vmax.f32 %v2046, 0.0
  %v2147 = vmax.f32 %v2051, 0.0
  %v2148 = vmax.f32 %v2054, 0.0
  %v2149 = vmax.f32 %v2059, 0.0
  %v2150 = vmax.f32 %v2062, 0.0
  %v2151 = vmax.f32 %v2067, 0.0
  %v2152 = vmax.f32 %v2070, 0.0
  %v2153 = vmax.f32 %v2075, 0.0
  %v2154 = vmax.f32 %v2078, 0.0
  %v2155 = vmax.f32 %v2083, 0.0
  %v2156 = vmax.f32 %v2086, 0.0
  %v2157 = vmax.f32 %v2091, 0.0
  %v2158 = vmax.f32 %v2094, 0.0
  %v2159 = vmax.f32 %v2099, 0.0
  %v2160 = vmax.f32 %v2102, 0.0
  %v2161 = vmax.f32 %v2107, 0.0
  %v2162 = vmax.f32 %v2110, 0.0
  %v2163 = vmax.f32 %v2115, 0.0
  %v2164 = vmax.f32 %v2118, 0.0
  %v2165 = vmax.f32 %v2123, 0.0
  %v2166 = vmax.f32 %v2126, 0.0
  %v2167 = vmax.f32 %v2131, 0.0
  %v2168 = vmax.f32 %v2134, 0.0
  %v2169 = vld [vmem:[%s11] sm:$0x1]
  %v2171 = vlaneseq
  %v2172 = vshrl.u32 %v2171, 7
  %v2173 = vsub.s32 0, %v2172
  %v2174 = vrot.slane %v2169, %v2173
  %v2176 = vmul.f32 %v2137, %v2174
  %v2177 = vmul.f32 %v2138, %v2174
  %v2178 = vmul.f32 %v2139, %v2174
  %v2179 = vmul.f32 %v2140, %v2174
  %v2180 = vmul.f32 %v2141, %v2174
  %v2181 = vmul.f32 %v2142, %v2174
  %v2182 = vmul.f32 %v2143, %v2174
  %v2183 = vmul.f32 %v2144, %v2174
  %v2184 = vmul.f32 %v2145, %v2174
  %v2185 = vmul.f32 %v2146, %v2174
  %v2186 = vmul.f32 %v2147, %v2174
  %v2187 = vmul.f32 %v2148, %v2174
  %v2188 = vmul.f32 %v2149, %v2174
  %v2189 = vmul.f32 %v2150, %v2174
  %v2190 = vmul.f32 %v2151, %v2174
  %v2191 = vmul.f32 %v2152, %v2174
  %v2192 = vld [vmem:[%s12] sm:$0x1]
  %v2194 = vlaneseq
  %v2195 = vshrl.u32 %v2194, 7
  %v2196 = vsub.s32 0, %v2195
  %v2197 = vrot.slane %v2192, %v2196
  %v2199 = vmul.f32 %v2153, %v2197
  %v2200 = vmul.f32 %v2154, %v2197
  %v2201 = vmul.f32 %v2155, %v2197
  %v2202 = vmul.f32 %v2156, %v2197
  %v2203 = vmul.f32 %v2157, %v2197
  %v2204 = vmul.f32 %v2158, %v2197
  %v2205 = vmul.f32 %v2159, %v2197
  %v2206 = vmul.f32 %v2160, %v2197
  %v2207 = vmul.f32 %v2161, %v2197
  %v2208 = vmul.f32 %v2162, %v2197
  %v2209 = vmul.f32 %v2163, %v2197
  %v2210 = vmul.f32 %v2164, %v2197
  %v2211 = vmul.f32 %v2165, %v2197
  %v2212 = vmul.f32 %v2166, %v2197
  %v2213 = vmul.f32 %v2167, %v2197
  %v2214 = vmul.f32 %v2168, %v2197
  %v2215 = vadd.f32 %v2176, %v2199
  %v2216 = vadd.f32 %v2177, %v2200
  %v2217 = vadd.f32 %v2178, %v2201
  %v2218 = vadd.f32 %v2179, %v2202
  %v2219 = vadd.f32 %v2180, %v2203
  %v2220 = vadd.f32 %v2181, %v2204
  %v2221 = vadd.f32 %v2182, %v2205
  %v2222 = vadd.f32 %v2183, %v2206
  %v2223 = vadd.f32 %v2184, %v2207
  %v2224 = vadd.f32 %v2185, %v2208
  %v2225 = vadd.f32 %v2186, %v2209
  %v2226 = vadd.f32 %v2187, %v2210
  %v2227 = vadd.f32 %v2188, %v2211
  %v2228 = vadd.f32 %v2189, %v2212
  %v2229 = vadd.f32 %v2190, %v2213
  %v2230 = vadd.f32 %v2191, %v2214
  %2231 = vadd.xlane.f32.xlu0 %v2215
  %v2232 = vpop.xlane.xlu0 %2231
  %2233 = vadd.xlane.f32.xlu0 %v2216
  %v2234 = vpop.xlane.xlu0 %2233
  %2235 = vadd.xlane.f32.xlu0 %v2217
  %v2236 = vpop.xlane.xlu0 %2235
  %2237 = vadd.xlane.f32.xlu0 %v2218
  %v2238 = vpop.xlane.xlu0 %2237
  %2239 = vadd.xlane.f32.xlu0 %v2219
  %v2240 = vpop.xlane.xlu0 %2239
  %2241 = vadd.xlane.f32.xlu0 %v2220
  %v2242 = vpop.xlane.xlu0 %2241
  %2243 = vadd.xlane.f32.xlu0 %v2221
  %v2244 = vpop.xlane.xlu0 %2243
  %2245 = vadd.xlane.f32.xlu0 %v2222
  %v2246 = vpop.xlane.xlu0 %2245
  %2247 = vadd.xlane.f32.xlu0 %v2223
  %v2248 = vpop.xlane.xlu0 %2247
  %2249 = vadd.xlane.f32.xlu0 %v2224
  %v2250 = vpop.xlane.xlu0 %2249
  %2251 = vadd.xlane.f32.xlu0 %v2225
  %v2252 = vpop.xlane.xlu0 %2251
  %2253 = vadd.xlane.f32.xlu0 %v2226
  %v2254 = vpop.xlane.xlu0 %2253
  %2255 = vadd.xlane.f32.xlu0 %v2227
  %v2256 = vpop.xlane.xlu0 %2255
  %2257 = vadd.xlane.f32.xlu0 %v2228
  %v2258 = vpop.xlane.xlu0 %2257
  %2259 = vadd.xlane.f32.xlu0 %v2229
  %v2260 = vpop.xlane.xlu0 %2259
  %2261 = vadd.xlane.f32.xlu0 %v2230
  %v2262 = vpop.xlane.xlu0 %2261
  %v2263 = vld [vmem:[#allocation2] sm:$0x1]
  %v2265 = vlaneseq
  %v2266 = vshrl.u32 %v2265, 7
  %v2267 = vsub.s32 0, %v2266
  %v2268 = vrot.slane %v2263, %v2267
  %v2270 = vadd.f32 %v2232, %v2268
  %v2271 = vadd.f32 %v2234, %v2268
  %v2272 = vadd.f32 %v2236, %v2268
  %v2273 = vadd.f32 %v2238, %v2268
  %v2274 = vadd.f32 %v2240, %v2268
  %v2275 = vadd.f32 %v2242, %v2268
  %v2276 = vadd.f32 %v2244, %v2268
  %v2277 = vadd.f32 %v2246, %v2268
  %v2278 = vadd.f32 %v2248, %v2268
  %v2279 = vadd.f32 %v2250, %v2268
  %v2280 = vadd.f32 %v2252, %v2268
  %v2281 = vadd.f32 %v2254, %v2268
  %v2282 = vadd.f32 %v2256, %v2268
  %v2283 = vadd.f32 %v2258, %v2268
  %v2284 = vadd.f32 %v2260, %v2268
  %v2285 = vadd.f32 %v2262, %v2268
  %vm2286 = vcmask 7168
  %2287 = vst.msk [vmem:[%s14] sm:$0xff] %vm2286, %v2270
  %2288 = vst.msk [vmem:[%s14 + $0x8] sm:$0xff] %vm2286, %v2271
  %2289 = vst.msk [vmem:[%s14 + $0x10] sm:$0xff] %vm2286, %v2272
  %2290 = vst.msk [vmem:[%s14 + $0x18] sm:$0xff] %vm2286, %v2273
  %2291 = vst.msk [vmem:[%s14 + $0x20] sm:$0xff] %vm2286, %v2274
  %2292 = vst.msk [vmem:[%s14 + $0x28] sm:$0xff] %vm2286, %v2275
  %2293 = vst.msk [vmem:[%s14 + $0x30] sm:$0xff] %vm2286, %v2276
  %2294 = vst.msk [vmem:[%s14 + $0x38] sm:$0xff] %vm2286, %v2277
  %2295 = vst.msk [vmem:[%s14 + $0x40] sm:$0xff] %vm2286, %v2278
  %2296 = vst.msk [vmem:[%s14 + $0x48] sm:$0xff] %vm2286, %v2279
  %2297 = vst.msk [vmem:[%s14 + $0x50] sm:$0xff] %vm2286, %v2280
  %2298 = vst.msk [vmem:[%s14 + $0x58] sm:$0xff] %vm2286, %v2281
  %2299 = vst.msk [vmem:[%s14 + $0x60] sm:$0xff] %vm2286, %v2282
  %2300 = vst.msk [vmem:[%s14 + $0x68] sm:$0xff] %vm2286, %v2283
  %2301 = vst.msk [vmem:[%s14 + $0x70] sm:$0xff] %vm2286, %v2284
  %2302 = vst.msk [vmem:[%s14 + $0x78] sm:$0xff] %vm2286, %v2285
  // Predicated region
  $region58: #{global_metric_linear.1} parent=0 // pred_check
    _
  $region59: #{global_metric_linear.1} parent=0 // pred_check_branch
    %2304 = sbr.rel (0) target = $region61
  $region60: #{global_metric_linear.1} parent=0 // pred_region
    _
  $region61: #{global_metric_linear.1} parent=0 // pred_fallthru
    _
  // Predicated region
  $region62: #{global_metric_linear.1} parent=0 // pred_check
    _
  $region63: #{global_metric_linear.1} parent=0 // pred_check_branch
    %2306 = sbr.rel (0) target = $region65
  $region64: #{global_metric_linear.1} parent=0 // pred_region
    _
  $region65: #{global_metric_linear.1} parent=0 // pred_fallthru
    _

</llo_original>
